<compile_context>
chip_gen: v7x
topology: tpu7x:2x2x1
jax: 0.10.0
libtpu: 0.0.40
codegen_flags: <defaults>
</compile_context>

<pallas_src>
import math
from functools import partial

import jax
import jax.numpy as jnp
import numpy as np
from jax.experimental import pallas as pl
from jax.experimental.pallas import tpu as pltpu

# ---------------- problem sizes (small, consistent with the module) ----------------
N = 16            # nodes per snapshot
E = 32            # edges per snapshot
IN_CH = 32        # in_channels
OUT_CH = 32       # out_channels
HEADS = 2
C = OUT_CH // HEADS           # per-head channels (TransformerConv(out_channels//2, heads=2))
HC = HEADS * C                # 32
MSG_DIM = 16
TIME_DIM = 8                  # time_enc.out_channels
EDGE_DIM = MSG_DIM + TIME_DIM # 24

# packed-slab geometry
K_AUG = IN_CH + 8             # node slab lanes: [x(32) | 1 | 0-pad(7)] -> 40
WE_ROWS = 64                  # [w_edge(24) ; head-mask(32) ; w_time ; b_time ; 0-pad]
OUT_PAD = 128                 # lane-dense output block width (sliced to HC outside)


# ---------------------------------- Pallas kernel ----------------------------------
def _gae_kernel(x_ref, edge_ref, oh_ref, w_ref, we_ref, out_ref, *,
                n, e, heads, c, msg_dim, time_dim):
    f32 = jnp.float32
    hc = heads * c
    edge_dim = time_dim + msg_dim
    scale = f32(1.0 / math.sqrt(c))

    x_aug = x_ref[0]                          # [N, K_AUG]  = [x | 1 | 0-pad]
    edge_in = edge_ref[0]                     # [E, Md+1]   = [msg | rel_t]
    oh = oh_ref[0].astype(f32)                # [2E+N, E]   exact 0/1 (bf16 -> f32)
    w_qkvs = w_ref[...]                       # [K_AUG, 4*hc]
    we = we_ref[...]                          # [WE_ROWS, hc]

    src = oh[0:e, 0:n]                        # [E, N]  one-hot(edge_index[0])
    dst = oh[e:2 * e, 0:n]                    # [E, N]  one-hot(edge_index[1])
    dst_t = oh[2 * e:2 * e + n, :]            # [N, E]

    # fused q|k|v|skip projection (+biases via the ones column), then src/dst gathers
    qkvs = jnp.dot(x_aug, w_qkvs, preferred_element_type=f32)        # [N, 4hc]
    g_src = jnp.dot(src, qkvs, preferred_element_type=f32)           # [E, 4hc]
    g_dst = jnp.dot(dst, qkvs, preferred_element_type=f32)           # [E, 4hc]

    # --- time encoding (rel_t precomputed in the wrapper): enc = cos(rel_t*w + b) ---
    rel_t = edge_in[:, msg_dim:msg_dim + 1]                          # [E, 1]
    w_time = we[edge_dim + hc:edge_dim + hc + 1, 0:time_dim]         # [1, Td]
    b_time = we[edge_dim + hc + 1:edge_dim + hc + 2, 0:time_dim]     # [1, Td]
    rel_t_enc = jnp.cos(rel_t * w_time + b_time)                     # [E, Td]

    # --- single fused edge projection: concat([enc, msg]) @ We ---
    msg = edge_in[:, 0:msg_dim]                                      # [E, Md]
    edge_feat = jnp.concatenate([rel_t_enc, msg], axis=-1)           # [E, Td+Md]
    e_proj = jnp.dot(edge_feat, we[0:edge_dim, :],
                     preferred_element_type=f32)                     # [E, hc]

    q_e = g_dst[:, 0:hc]
    k_e = g_src[:, hc:2 * hc] + e_proj
    v_e = g_src[:, 2 * hc:3 * hc] + e_proj
    skip = qkvs[:, 3 * hc:4 * hc]                                    # [N, hc]

    # --- per-head logits, replicated over each head's channels, via block-diag mask ---
    head_mask = we[edge_dim:edge_dim + hc, :]                        # [hc, hc] 0/1
    logits = jnp.dot(q_e * k_e, head_mask,
                     preferred_element_type=f32) * scale             # [E, hc]

    # --- segment softmax over edges sharing a destination (per-head global max) ---
    gmax = jnp.max(logits, axis=0, keepdims=True)                    # [1, hc]
    ex = jnp.exp(logits - gmax)                                      # [E, hc]
    denom = jnp.dot(dst_t, ex, preferred_element_type=f32)           # [N, hc]
    denom_e = jnp.dot(dst, denom, preferred_element_type=f32)        # [E, hc]
    alpha = ex / denom_e                                             # [E, hc] (head-broadcast)
    # TODO(synk): training-mode Dropout(p=0.1) on alpha omitted (eval/inference semantics).

    agg = jnp.dot(dst_t, alpha * v_e, preferred_element_type=f32)    # [N, hc]
    res = agg + skip                                                 # [N, hc]

    # lane-dense 128-wide store; the wrapper slices [:, :, :hc]
    out_ref[0] = jnp.concatenate(
        [res, jnp.zeros((n, OUT_PAD - hc), f32)], axis=-1)


# ----------------------- weight-slab assembly (hoisted, run once) -------------------
def prepare_weight_slabs(p):
    f32 = jnp.float32
    # fused node-projection slab [K_AUG, 4*HC]:
    #   cols [0:HC)=Wq [HC:2HC)=Wk [2HC:3HC)=Wv [3HC:4HC)=Wskip ; row IN_CH = biases
    W = jnp.zeros((K_AUG, 4 * HC), f32)
    W = W.at[:IN_CH, 0 * HC:1 * HC].set(p["w_q"].astype(f32))
    W = W.at[:IN_CH, 1 * HC:2 * HC].set(p["w_k"].astype(f32))
    W = W.at[:IN_CH, 2 * HC:3 * HC].set(p["w_v"].astype(f32))
    W = W.at[:IN_CH, 3 * HC:4 * HC].set(p["w_skip"].astype(f32))
    W = W.at[IN_CH, 0 * HC:1 * HC].set(p["b_q"].reshape(-1).astype(f32))
    W = W.at[IN_CH, 1 * HC:2 * HC].set(p["b_k"].reshape(-1).astype(f32))
    W = W.at[IN_CH, 2 * HC:3 * HC].set(p["b_v"].reshape(-1).astype(f32))
    W = W.at[IN_CH, 3 * HC:4 * HC].set(p["b_skip"].reshape(-1).astype(f32))

    # edge slab [WE_ROWS, HC]: rows 0:24 = lin_edge weight (time rows first, then msg),
    # rows 24:56 = block-diagonal head mask, rows 56/57 = time-encoder w/b (lanes 0:8)
    we = jnp.zeros((WE_ROWS, HC), f32)
    we = we.at[:EDGE_DIM, :].set(p["w_edge"].astype(f32))
    ch = np.arange(HC)
    head_mask = (ch[:, None] // C == ch[None, :] // C).astype(np.float32)   # [HC, HC]
    we = we.at[EDGE_DIM:EDGE_DIM + HC, :].set(jnp.asarray(head_mask))
    we = we.at[EDGE_DIM + HC, :TIME_DIM].set(p["w_time"].reshape(-1).astype(f32))
    we = we.at[EDGE_DIM + HC + 1, :TIME_DIM].set(p["b_time"].reshape(-1).astype(f32))
    return W, we


# ------------------------------------ wrapper --------------------------------------
def graph_attention_embedding(x, last_update, edge_index, t, msg, W, we):
    """Batched forward.  x:[B,N,in]  last_update:[B,N]  edge_index:[B,2,E] int32
    t:[B,E]  msg:[B,E,Md]  W/we: prepared weight slabs (prepare_weight_slabs)."""
    f32 = jnp.float32
    b, n, in_ch = x.shape
    e = edge_index.shape[-1]
    assert e >= n, "one-hot slab packing assumes E >= N"

    src_idx = edge_index[:, 0, :]
    dst_idx = edge_index[:, 1, :]

    # rel_t computed here (cheap [B,E] gather) -> weight slab stays exactly 128 lanes
    rel_t = jnp.take_along_axis(last_update.astype(f32), src_idx, axis=1) - t.astype(f32)
    edge_in = jnp.concatenate([msg.astype(f32), rel_t[..., None]], axis=-1)  # [B,E,Md+1]

    # node slab [B, N, K_AUG] = [x | 1 | 0-pad]
    x_aug = jnp.concatenate(
        [x.astype(f32), jnp.ones((b, n, 1), f32),
         jnp.zeros((b, n, K_AUG - in_ch - 1), f32)], axis=-1)

    # all one-hot gather/scatter matrices in ONE bf16 slab: [src ; dst ; dst^T]
    src_oh = jax.nn.one_hot(src_idx, n, dtype=jnp.bfloat16)          # [B,E,N]
    dst_oh = jax.nn.one_hot(dst_idx, n, dtype=jnp.bfloat16)          # [B,E,N]
    pad = ((0, 0), (0, 0), (0, e - n))
    oh = jnp.concatenate([jnp.pad(src_oh, pad), jnp.pad(dst_oh, pad),
                          jnp.swapaxes(dst_oh, 1, 2)], axis=1)       # [B, 2E+N, E]

    kernel = partial(_gae_kernel, n=n, e=e, heads=HEADS, c=C,
                     msg_dim=MSG_DIM, time_dim=TIME_DIM)
    out = pl.pallas_call(
        kernel,
        out_shape=jax.ShapeDtypeStruct((b, n, OUT_PAD), f32),
        grid=(b,),
        in_specs=[
            pl.BlockSpec((1, n, K_AUG), lambda i: (i, 0, 0)),
            pl.BlockSpec((1, e, MSG_DIM + 1), lambda i: (i, 0, 0)),
            pl.BlockSpec((1, 2 * e + n, e), lambda i: (i, 0, 0)),
            pl.BlockSpec((K_AUG, 4 * HC), lambda i: (0, 0)),      # resident (const index)
            pl.BlockSpec((WE_ROWS, HC), lambda i: (0, 0)),        # resident (const index)
        ],
        out_specs=pl.BlockSpec((1, n, OUT_PAD), lambda i: (i, 0, 0)),
        compiler_params=pltpu.CompilerParams(
            dimension_semantics=("parallel",)),
    )(x_aug, edge_in, oh, W, we)
    return out[:, :, :HC]


# ------------------------------- pure-JAX reference --------------------------------
def reference(x, last_update, edge_index, t, msg, p):
    src, dst = edge_index[0], edge_index[1]
    n = x.shape[0]
    e = src.shape[0]
    rel_t = (last_update[src].astype(x.dtype) - t.astype(x.dtype))
    rel_t_enc = jnp.cos(rel_t[:, None] * p["w_time"] + p["b_time"])
    edge_attr = jnp.concatenate([rel_t_enc, msg], axis=-1)
    e_proj = edge_attr @ p["w_edge"]
    q = x @ p["w_q"] + p["b_q"]
    k = x @ p["w_k"] + p["b_k"]
    v = x @ p["w_v"] + p["b_v"]
    skip = x @ p["w_skip"] + p["b_skip"]
    qe = q[dst].reshape(e, HEADS, C)
    ke = (k[src] + e_proj).reshape(e, HEADS, C)
    ve = (v[src] + e_proj).reshape(e, HEADS, C)
    logits = (qe * ke).sum(-1) / math.sqrt(C)                    # [E, H]
    m = jax.ops.segment_max(logits, dst, num_segments=n)
    m = jnp.where(jnp.isfinite(m), m, 0.0)
    ex = jnp.exp(logits - m[dst])
    den = jax.ops.segment_sum(ex, dst, num_segments=n)
    alpha = ex / den[dst]
    agg = jax.ops.segment_sum(alpha[:, :, None] * ve, dst, num_segments=n)
    return agg.reshape(n, HEADS * C) + skip


# ------------------------------------- main -----------------------------------------
if __name__ == "__main__":
    B = 8
    key = jax.random.PRNGKey(0)
    ks = jax.random.split(key, 16)

    def init(k, shape, scale=0.1):
        return jax.random.normal(k, shape, dtype=jnp.float32) * scale

    params = {
        "w_time": init(ks[0], (1, TIME_DIM)),
        "b_time": init(ks[1], (1, TIME_DIM)),
        "w_q": init(ks[2], (IN_CH, HEADS * C)),
        "b_q": init(ks[3], (1, HEADS * C)),
        "w_k": init(ks[4], (IN_CH, HEADS * C)),
        "b_k": init(ks[5], (1, HEADS * C)),
        "w_v": init(ks[6], (IN_CH, HEADS * C)),
        "b_v": init(ks[7], (1, HEADS * C)),
        "w_edge": init(ks[8], (EDGE_DIM, HEADS * C)),   # lin_edge: bias=False in PyG
        "w_skip": init(ks[9], (IN_CH, HEADS * C)),
        "b_skip": init(ks[10], (1, HEADS * C)),
    }

    x = jax.random.normal(ks[11], (B, N, IN_CH), dtype=jnp.float32)
    last_update = jax.random.uniform(ks[12], (B, N), dtype=jnp.float32, maxval=100.0)
    t = jax.random.uniform(ks[13], (B, E), dtype=jnp.float32, maxval=100.0)
    msg = jax.random.normal(ks[14], (B, E, MSG_DIM), dtype=jnp.float32)
    edge_index = jax.random.randint(ks[15], (B, 2, E), 0, N, dtype=jnp.int32)

    # weight slabs assembled once (hoisted out of the per-step path)
    W, we = prepare_weight_slabs(params)

    fwd = jax.jit(graph_attention_embedding)
    out = jax.block_until_ready(fwd(x, last_update, edge_index, t, msg, W, we))

    ref = jnp.stack([reference(x[b], last_update[b], edge_index[b], t[b], msg[b], params)
                     for b in range(B)])
    ref = jax.block_until_ready(ref)
    np.testing.assert_allclose(np.asarray(out), np.asarray(ref), rtol=1e-4, atol=1e-4)

    print("KERNEL_OK")
</pallas_src>

<mosaic_0001>
module attributes {stable_mosaic.version = 11 : i64} {
  func.func @_gae_kernel(%arg0: i32, %arg1: memref<1x16x40xf32, #tpu.memory_space<vmem>>, %arg2: memref<1x32x17xf32, #tpu.memory_space<vmem>>, %arg3: memref<1x80x32xbf16, #tpu.memory_space<vmem>>, %arg4: memref<40x128xf32, #tpu.memory_space<vmem>>, %arg5: memref<64x32xf32, #tpu.memory_space<vmem>>, %arg6: memref<1x16x128xf32, #tpu.memory_space<vmem>>) attributes {dimension_semantics = [#tpu.dimension_semantics<parallel>], iteration_bounds = array<i64: 8>, scalar_prefetch = 0 : i64, scratch_operands = 0 : i64, tpu.core_type = #tpu.core_type<tc>, window_params = [{transform_indices = @transform_0, window_bounds = array<i64: 1, 16, 40>}, {transform_indices = @transform_1, window_bounds = array<i64: 1, 32, 17>}, {transform_indices = @transform_2, window_bounds = array<i64: 1, 80, 32>}, {pipeline_mode = #tpu.pipeline_mode<synchronous>, transform_indices = @transform_3, window_bounds = array<i64: 40, 128>}, {pipeline_mode = #tpu.pipeline_mode<synchronous>, transform_indices = @transform_4, window_bounds = array<i64: 64, 32>}, {transform_indices = @transform_5, window_bounds = array<i64: 1, 16, 128>}]} {
    %c0 = arith.constant 0 : index
    %c0_0 = arith.constant 0 : index
    %c0_1 = arith.constant 0 : index
    %0 = vector.load %arg1[%c0, %c0_0, %c0_1] : memref<1x16x40xf32, #tpu.memory_space<vmem>>, vector<1x16x40xf32>
    %1 = vector.shape_cast %0 : vector<1x16x40xf32> to vector<16x40xf32>
    %c0_2 = arith.constant 0 : index
    %c0_3 = arith.constant 0 : index
    %c0_4 = arith.constant 0 : index
    %2 = vector.load %arg2[%c0_2, %c0_3, %c0_4] : memref<1x32x17xf32, #tpu.memory_space<vmem>>, vector<1x32x17xf32>
    %3 = vector.shape_cast %2 : vector<1x32x17xf32> to vector<32x17xf32>
    %c0_5 = arith.constant 0 : index
    %c0_6 = arith.constant 0 : index
    %c0_7 = arith.constant 0 : index
    %4 = vector.load %arg3[%c0_5, %c0_6, %c0_7] : memref<1x80x32xbf16, #tpu.memory_space<vmem>>, vector<1x80x32xbf16>
    %5 = vector.shape_cast %4 : vector<1x80x32xbf16> to vector<80x32xbf16>
    %6 = arith.extf %5 : vector<80x32xbf16> to vector<80x32xf32>
    %c0_8 = arith.constant 0 : index
    %c0_9 = arith.constant 0 : index
    %7 = vector.load %arg4[%c0_8, %c0_9] : memref<40x128xf32, #tpu.memory_space<vmem>>, vector<40x128xf32>
    %c0_10 = arith.constant 0 : index
    %c0_11 = arith.constant 0 : index
    %8 = vector.load %arg5[%c0_10, %c0_11] : memref<64x32xf32, #tpu.memory_space<vmem>>, vector<64x32xf32>
    %9 = vector.extract_strided_slice %6 {offsets = [0, 0], sizes = [32, 16], strides = [1, 1]} : vector<80x32xf32> to vector<32x16xf32>
    %10 = vector.extract_strided_slice %6 {offsets = [32, 0], sizes = [32, 16], strides = [1, 1]} : vector<80x32xf32> to vector<32x16xf32>
    %11 = vector.extract_strided_slice %6 {offsets = [64, 0], sizes = [16, 32], strides = [1, 1]} : vector<80x32xf32> to vector<16x32xf32>
    %cst = arith.constant dense<0.000000e+00> : vector<16x128xf32>
    %12 = tpu.matmul %1, %7, %cst {dimension_numbers = #tpu.dot_dimension_numbers<[1], [0], [0], [1], [0, 0, 1, 1], [], []>} : vector<16x40xf32>, vector<40x128xf32>, vector<16x128xf32> -> vector<16x128xf32>
    %cst_12 = arith.constant dense<0.000000e+00> : vector<32x128xf32>
    %13 = tpu.matmul %9, %12, %cst_12 {dimension_numbers = #tpu.dot_dimension_numbers<[1], [0], [0], [1], [0, 0, 1, 1], [], []>} : vector<32x16xf32>, vector<16x128xf32>, vector<32x128xf32> -> vector<32x128xf32>
    %cst_13 = arith.constant dense<0.000000e+00> : vector<32x128xf32>
    %14 = tpu.matmul %10, %12, %cst_13 {dimension_numbers = #tpu.dot_dimension_numbers<[1], [0], [0], [1], [0, 0, 1, 1], [], []>} : vector<32x16xf32>, vector<16x128xf32>, vector<32x128xf32> -> vector<32x128xf32>
    %15 = vector.extract_strided_slice %3 {offsets = [0, 16], sizes = [32, 1], strides = [1, 1]} : vector<32x17xf32> to vector<32x1xf32>
    %16 = vector.extract_strided_slice %8 {offsets = [56, 0], sizes = [1, 8], strides = [1, 1]} : vector<64x32xf32> to vector<1x8xf32>
    %17 = vector.extract_strided_slice %8 {offsets = [57, 0], sizes = [1, 8], strides = [1, 1]} : vector<64x32xf32> to vector<1x8xf32>
    %18 = vector.broadcast %15 : vector<32x1xf32> to vector<32x8xf32>
    %19 = vector.broadcast %16 : vector<1x8xf32> to vector<32x8xf32>
    %20 = arith.mulf %18, %19 : vector<32x8xf32>
    %21 = vector.broadcast %17 : vector<1x8xf32> to vector<32x8xf32>
    %22 = arith.addf %20, %21 : vector<32x8xf32>
    %23 = math.cos %22 : vector<32x8xf32>
    %24 = vector.extract_strided_slice %3 {offsets = [0, 0], sizes = [32, 16], strides = [1, 1]} : vector<32x17xf32> to vector<32x16xf32>
    %25 = tpu.concatenate %23, %24 in 1 : vector<32x8xf32>, vector<32x16xf32> -> vector<32x24xf32>
    %26 = vector.extract_strided_slice %8 {offsets = [0, 0], sizes = [24, 32], strides = [1, 1]} : vector<64x32xf32> to vector<24x32xf32>
    %cst_14 = arith.constant dense<0.000000e+00> : vector<32x32xf32>
    %27 = tpu.matmul %25, %26, %cst_14 {dimension_numbers = #tpu.dot_dimension_numbers<[1], [0], [0], [1], [0, 0, 1, 1], [], []>} : vector<32x24xf32>, vector<24x32xf32>, vector<32x32xf32> -> vector<32x32xf32>
    %28 = vector.extract_strided_slice %14 {offsets = [0, 0], sizes = [32, 32], strides = [1, 1]} : vector<32x128xf32> to vector<32x32xf32>
    %29 = vector.extract_strided_slice %13 {offsets = [0, 32], sizes = [32, 32], strides = [1, 1]} : vector<32x128xf32> to vector<32x32xf32>
    %30 = arith.addf %29, %27 : vector<32x32xf32>
    %31 = vector.extract_strided_slice %13 {offsets = [0, 64], sizes = [32, 32], strides = [1, 1]} : vector<32x128xf32> to vector<32x32xf32>
    %32 = arith.addf %31, %27 : vector<32x32xf32>
    %33 = vector.extract_strided_slice %12 {offsets = [0, 96], sizes = [16, 32], strides = [1, 1]} : vector<16x128xf32> to vector<16x32xf32>
    %34 = vector.extract_strided_slice %8 {offsets = [24, 0], sizes = [32, 32], strides = [1, 1]} : vector<64x32xf32> to vector<32x32xf32>
    %35 = arith.mulf %28, %30 : vector<32x32xf32>
    %cst_15 = arith.constant dense<0.000000e+00> : vector<32x32xf32>
    %36 = tpu.matmul %35, %34, %cst_15 {dimension_numbers = #tpu.dot_dimension_numbers<[1], [0], [0], [1], [0, 0, 1, 1], [], []>} : vector<32x32xf32>, vector<32x32xf32>, vector<32x32xf32> -> vector<32x32xf32>
    %cst_16 = arith.constant 2.500000e-01 : f32
    %37 = vector.broadcast %cst_16 : f32 to vector<32x32xf32>
    %38 = arith.mulf %36, %37 : vector<32x32xf32>
    %cst_17 = arith.constant dense<0xFF800000> : vector<32xf32>
    %39 = vector.multi_reduction <maximumf>, %38, %cst_17 [0] : vector<32x32xf32> to vector<32xf32>
    %40 = vector.shape_cast %39 : vector<32xf32> to vector<1x32xf32>
    %41 = vector.broadcast %40 : vector<1x32xf32> to vector<32x32xf32>
    %42 = arith.subf %38, %41 : vector<32x32xf32>
    %43 = math.exp %42 : vector<32x32xf32>
    %cst_18 = arith.constant dense<0.000000e+00> : vector<16x32xf32>
    %44 = tpu.matmul %11, %43, %cst_18 {dimension_numbers = #tpu.dot_dimension_numbers<[1], [0], [0], [1], [0, 0, 1, 1], [], []>} : vector<16x32xf32>, vector<32x32xf32>, vector<16x32xf32> -> vector<16x32xf32>
    %cst_19 = arith.constant dense<0.000000e+00> : vector<32x32xf32>
    %45 = tpu.matmul %10, %44, %cst_19 {dimension_numbers = #tpu.dot_dimension_numbers<[1], [0], [0], [1], [0, 0, 1, 1], [], []>} : vector<32x16xf32>, vector<16x32xf32>, vector<32x32xf32> -> vector<32x32xf32>
    %46 = arith.divf %43, %45 : vector<32x32xf32>
    %47 = arith.mulf %46, %32 : vector<32x32xf32>
    %cst_20 = arith.constant dense<0.000000e+00> : vector<16x32xf32>
    %48 = tpu.matmul %11, %47, %cst_20 {dimension_numbers = #tpu.dot_dimension_numbers<[1], [0], [0], [1], [0, 0, 1, 1], [], []>} : vector<16x32xf32>, vector<32x32xf32>, vector<16x32xf32> -> vector<16x32xf32>
    %49 = arith.addf %48, %33 : vector<16x32xf32>
    %cst_21 = arith.constant 0.000000e+00 : f32
    %50 = vector.broadcast %cst_21 : f32 to vector<16x96xf32>
    %51 = tpu.concatenate %49, %50 in 1 : vector<16x32xf32>, vector<16x96xf32> -> vector<16x128xf32>
    %c0_22 = arith.constant 0 : index
    %c0_23 = arith.constant 0 : index
    %c0_24 = arith.constant 0 : index
    %52 = vector.load %arg6[%c0_22, %c0_23, %c0_24] : memref<1x16x128xf32, #tpu.memory_space<vmem>>, vector<1x16x128xf32>
    %53 = vector.shape_cast %52 : vector<1x16x128xf32> to vector<16x128xf32>
    %54 = vector.shape_cast %51 : vector<16x128xf32> to vector<1x16x128xf32>
    tpu.vector_store %arg6[%c0_22, %c0_23, %c0_24], %54 {strides = array<i32>} : memref<1x16x128xf32, #tpu.memory_space<vmem>>, vector<1x16x128xf32>,
    return
  }
  func.func @transform_0(%arg0: i32) -> (i32, i32, i32) {
    %c0_i32 = arith.constant 0 : i32
    %c0_i32_0 = arith.constant 0 : i32
    %c0_i32_1 = arith.constant 0 : i32
    return %arg0, %c0_i32, %c0_i32_0 : i32, i32, i32
  }
  func.func @transform_1(%arg0: i32) -> (i32, i32, i32) {
    %c0_i32 = arith.constant 0 : i32
    %c0_i32_0 = arith.constant 0 : i32
    %c0_i32_1 = arith.constant 0 : i32
    return %arg0, %c0_i32, %c0_i32_0 : i32, i32, i32
  }
  func.func @transform_2(%arg0: i32) -> (i32, i32, i32) {
    %c0_i32 = arith.constant 0 : i32
    %c0_i32_0 = arith.constant 0 : i32
    %c0_i32_1 = arith.constant 0 : i32
    return %arg0, %c0_i32, %c0_i32_0 : i32, i32, i32
  }
  func.func @transform_3(%arg0: i32) -> (i32, i32) {
    %c0_i32 = arith.constant 0 : i32
    %c0_i32_0 = arith.constant 0 : i32
    %c0_i32_1 = arith.constant 0 : i32
    return %c0_i32, %c0_i32_0 : i32, i32
  }
  func.func @transform_4(%arg0: i32) -> (i32, i32) {
    %c0_i32 = arith.constant 0 : i32
    %c0_i32_0 = arith.constant 0 : i32
    %c0_i32_1 = arith.constant 0 : i32
    return %c0_i32, %c0_i32_0 : i32, i32
  }
  func.func @transform_5(%arg0: i32) -> (i32, i32, i32) {
    %c0_i32 = arith.constant 0 : i32
    %c0_i32_0 = arith.constant 0 : i32
    %c0_i32_1 = arith.constant 0 : i32
    return %arg0, %c0_i32, %c0_i32_0 : i32, i32, i32
  }
}

</mosaic_0001>

<llo_original>
// kernel: graph_attention_embedding.1
$region0: #{graph_attention_embedding.1}
  #allocation0 [shape = 'u32[]', space=smem, size = 0x4, offset = 0x4, fixed_abs, tag = 'smem constant byte address 0x4 - core index']
  #allocation1 [shape = 'u32[144,128]{1,0:T(1,128)}', space=vmem, size = 0x12000, scoped, tag = 'internal scratch']
  %s0 = inlined_call_operand.vmem [shape: f32[8,16,40], index: 0, kind: input, shape index: {}]
  %s1 = inlined_call_operand.vmem [shape: f32[8,32,17], index: 1, kind: input, shape index: {}]
  %s2 = inlined_call_operand.vmem [shape: bf16[8,80,32], index: 2, kind: input, shape index: {}]
  %s3 = inlined_call_operand.vmem [shape: f32[40,128], index: 3, kind: input, shape index: {}]
  %s4 = inlined_call_operand.vmem [shape: f32[64,32], index: 4, kind: input, shape index: {}]
  %s5 = inlined_call_operand.hbm [shape: f32[8,16,128], index: 5, kind: output, shape index: {}]
  %s6 = sld [smem:[#allocation0]]
  $region53: #{graph_attention_embedding.1} parent=0
    _
  %s8 = ssub.s32 1, %s6
  %s9 = scalar_select 0, %s8, %s6
  $region1: #{graph_attention_embedding.1} parent=0
    #allocation2 [shape = 'u8[16384]{0}', space=vmem, size = 0x4000, scoped, tag = 'output window, operand 0']
    #allocation3 [shape = 's32[2]{0}', space=sflag, size = 0x8, scoped, tag = 'scoped memory for graph_attention_embedding.1']
    %10 = vsyncpa [#allocation3], 0
    %s11 = scalar_lea.sflag [#allocation3], 1
    %12 = vsyncpa %s11, 0
    loop: start=0, step=1, limit=10
    $region2: #{graph_attention_embedding.1} parent=1 // loop_pre_header
      _
    $region3: #{graph_attention_embedding.1} parent=1 // loop_header
      %s14 = sphi 0, %s18
      %p15 = scmp.ge.s32.totalorder %s14, 10
      %s24 = sphi 0, %s26
      %s27 = sphi 0, %s24
      %s28 = sphi 0, %s27
      %s44 = sphi 0, %s28
      %s50 = sphi 0, %s52
      %s53 = sphi 0, %s50
      %s54 = sphi 0, %s53
      %s70 = sphi 0, %s54
      %s76 = sphi 0, %s78
      %s79 = sphi 0, %s76
      %s80 = sphi 0, %s79
      %s96 = sphi 0, %s80
      %s100 = sphi 0, %s100
      %s102 = sphi 0, %s100
      %s103 = sphi 0, %s102
      %s117 = sphi 0, %s103
      %s121 = sphi 0, %s121
      %s123 = sphi 0, %s121
      %s124 = sphi 0, %s123
      %s138 = sphi 0, %s124
      %s144 = sphi 0, %s146
      %s147 = sphi 0, %s144
      %s148 = sphi 0, %s147
      %s164 = sphi 0, %s148
    $region4: #{graph_attention_embedding.1} parent=1 // loop_header_branch
      %17 = sbr.rel (%p15) target = $region8
    $region5: #{graph_attention_embedding.1} parent=1 // loop_body
      %s19 = ssub.s32 %s14, 1
      %s20 = ssub.s32 %s14, 2
      %s21 = sadd.s32 %s14, 1
      %s22 = ssub.s32 %s14, %s21
      %p23 = scmp.eq.s32.totalorder %s22, 0
      %s25 = sadd.s32 %s24, 1
      %s26 = scalar_select %p23, %s24, %s25
      %p29 = pneg %p23
      %p30 = scmp.eq.s32.totalorder %s14, 7
      %p31 = por %p29, %p30
      %p32 = scmp.ne.s32.totalorder %s24, %s27
      %p33 = scmp.eq.s32.totalorder %s14, 0
      %p34 = por %p32, %p33
      %p35 = scmp.ne.s32.totalorder %s24, %s27
      %p36 = scmp.eq.s32.totalorder %s19, 7
      %p37 = por %p35, %p36
      %p38 = scmp.ne.s32.totalorder %s27, %s28
      %p39 = scmp.eq.s32.totalorder %s19, 0
      %p40 = por %p38, %p39
      %p41 = scmp.ne.s32.totalorder %s27, %s28
      %p42 = scmp.eq.s32.totalorder %s20, 7
      %p43 = por %p41, %p42
      %p45 = scmp.ne.s32.totalorder %s28, %s44
      %p46 = scmp.eq.s32.totalorder %s20, 0
      %p47 = por %p45, %p46
      %s48 = ssub.s32 %s14, %s21
      %p49 = scmp.eq.s32.totalorder %s48, 0
      %s51 = sadd.s32 %s50, 1
      %s52 = scalar_select %p49, %s50, %s51
      %p55 = pneg %p49
      %p56 = scmp.eq.s32.totalorder %s14, 7
      %p57 = por %p55, %p56
      %p58 = scmp.ne.s32.totalorder %s50, %s53
      %p59 = scmp.eq.s32.totalorder %s14, 0
      %p60 = por %p58, %p59
      %p61 = scmp.ne.s32.totalorder %s50, %s53
      %p62 = scmp.eq.s32.totalorder %s19, 7
      %p63 = por %p61, %p62
      %p64 = scmp.ne.s32.totalorder %s53, %s54
      %p65 = scmp.eq.s32.totalorder %s19, 0
      %p66 = por %p64, %p65
      %p67 = scmp.ne.s32.totalorder %s53, %s54
      %p68 = scmp.eq.s32.totalorder %s20, 7
      %p69 = por %p67, %p68
      %p71 = scmp.ne.s32.totalorder %s54, %s70
      %p72 = scmp.eq.s32.totalorder %s20, 0
      %p73 = por %p71, %p72
      %s74 = ssub.s32 %s14, %s21
      %p75 = scmp.eq.s32.totalorder %s74, 0
      %s77 = sadd.s32 %s76, 1
      %s78 = scalar_select %p75, %s76, %s77
      %p81 = pneg %p75
      %p82 = scmp.eq.s32.totalorder %s14, 7
      %p83 = por %p81, %p82
      %p84 = scmp.ne.s32.totalorder %s76, %s79
      %p85 = scmp.eq.s32.totalorder %s14, 0
      %p86 = por %p84, %p85
      %p87 = scmp.ne.s32.totalorder %s76, %s79
      %p88 = scmp.eq.s32.totalorder %s19, 7
      %p89 = por %p87, %p88
      %p90 = scmp.ne.s32.totalorder %s79, %s80
      %p91 = scmp.eq.s32.totalorder %s19, 0
      %p92 = por %p90, %p91
      %p93 = scmp.ne.s32.totalorder %s79, %s80
      %p94 = scmp.eq.s32.totalorder %s20, 7
      %p95 = por %p93, %p94
      %p97 = scmp.ne.s32.totalorder %s80, %s96
      %p98 = scmp.eq.s32.totalorder %s20, 0
      %p99 = por %p97, %p98
      %s101 = sadd.s32 %s100, 1
      %p104 = scmp.eq.s32.totalorder %s14, 7
      %p105 = scmp.ne.s32.totalorder %s100, %s102
      %p106 = scmp.eq.s32.totalorder %s14, 0
      %p107 = por %p105, %p106
      %p108 = scmp.ne.s32.totalorder %s100, %s102
      %p109 = scmp.eq.s32.totalorder %s19, 7
      %p110 = por %p108, %p109
      %p111 = scmp.ne.s32.totalorder %s102, %s103
      %p112 = scmp.eq.s32.totalorder %s19, 0
      %p113 = por %p111, %p112
      %p114 = scmp.ne.s32.totalorder %s102, %s103
      %p115 = scmp.eq.s32.totalorder %s20, 7
      %p116 = por %p114, %p115
      %p118 = scmp.ne.s32.totalorder %s103, %s117
      %p119 = scmp.eq.s32.totalorder %s20, 0
      %p120 = por %p118, %p119
      %s122 = sadd.s32 %s121, 1
      %p125 = scmp.eq.s32.totalorder %s14, 7
      %p126 = scmp.ne.s32.totalorder %s121, %s123
      %p127 = scmp.eq.s32.totalorder %s14, 0
      %p128 = por %p126, %p127
      %p129 = scmp.ne.s32.totalorder %s121, %s123
      %p130 = scmp.eq.s32.totalorder %s19, 7
      %p131 = por %p129, %p130
      %p132 = scmp.ne.s32.totalorder %s123, %s124
      %p133 = scmp.eq.s32.totalorder %s19, 0
      %p134 = por %p132, %p133
      %p135 = scmp.ne.s32.totalorder %s123, %s124
      %p136 = scmp.eq.s32.totalorder %s20, 7
      %p137 = por %p135, %p136
      %p139 = scmp.ne.s32.totalorder %s124, %s138
      %p140 = scmp.eq.s32.totalorder %s20, 0
      %p141 = por %p139, %p140
      %s142 = ssub.s32 %s14, %s21
      %p143 = scmp.eq.s32.totalorder %s142, 0
      %s145 = sadd.s32 %s144, 1
      %s146 = scalar_select %p143, %s144, %s145
      %p149 = pneg %p143
      %p150 = scmp.eq.s32.totalorder %s14, 7
      %p151 = por %p149, %p150
      %p152 = scmp.ne.s32.totalorder %s144, %s147
      %p153 = scmp.eq.s32.totalorder %s14, 0
      %p154 = por %p152, %p153
      %p155 = scmp.ne.s32.totalorder %s144, %s147
      %p156 = scmp.eq.s32.totalorder %s19, 7
      %p157 = por %p155, %p156
      %p158 = scmp.ne.s32.totalorder %s147, %s148
      %p159 = scmp.eq.s32.totalorder %s19, 0
      %p160 = por %p158, %p159
      %p161 = scmp.ne.s32.totalorder %s147, %s148
      %p162 = scmp.eq.s32.totalorder %s20, 7
      %p163 = por %p161, %p162
      %p165 = scmp.ne.s32.totalorder %s148, %s164
      %p166 = scmp.eq.s32.totalorder %s20, 0
      %p167 = por %p165, %p166
      %p168 = scmp.le.s32.totalorder 1, %s14
      %p169 = scmp.lt.s32.totalorder %s14, 9
      %p170 = pnand %p168, %p169
      %p171 = pneg %p170
      // Predicated region
      $region9: #{graph_attention_embedding.1} parent=5 // pred_check
        _
      $region10: #{graph_attention_embedding.1} parent=5 // pred_check_branch
        %173 = sbr.rel (%p170) target = $region12
      $region11: #{graph_attention_embedding.1} parent=5 // pred_region
        %s174 = ssub.s32 %s14, 1
        // Predicated region
        $region13: #{graph_attention_embedding.1} parent=11 // pred_check
          %p175 = pneg %p113
        $region14: #{graph_attention_embedding.1} parent=11 // pred_check_branch
          %177 = sbr.rel (%p175) target = $region16
        $region15: #{graph_attention_embedding.1} parent=11 // pred_region
          _
        $region16: #{graph_attention_embedding.1} parent=11 // pred_fallthru
          _
        // Predicated region
        $region17: #{graph_attention_embedding.1} parent=11 // pred_check
          %p178 = pneg %p134
        $region18: #{graph_attention_embedding.1} parent=11 // pred_check_branch
          %180 = sbr.rel (%p178) target = $region20
        $region19: #{graph_attention_embedding.1} parent=11 // pred_region
          _
        $region20: #{graph_attention_embedding.1} parent=11 // pred_fallthru
          _
      $region12: #{graph_attention_embedding.1} parent=5 // pred_fallthru
        _
      %p181 = scmp.lt.s32.totalorder %s14, 8
      // Predicated region
      $region21: #{graph_attention_embedding.1} parent=5 // pred_check
        %p182 = pneg %p181
      $region22: #{graph_attention_embedding.1} parent=5 // pred_check_branch
        %184 = sbr.rel (%p182) target = $region24
      $region23: #{graph_attention_embedding.1} parent=5 // pred_region
        // Predicated region
        $region25: #{graph_attention_embedding.1} parent=23 // pred_check
          %p185 = pneg %p34
        $region26: #{graph_attention_embedding.1} parent=23 // pred_check_branch
          %187 = sbr.rel (%p185) target = $region28
        $region27: #{graph_attention_embedding.1} parent=23 // pred_region
          %p188 = scmp.lt.s32.totalorder %s14, 7
          %s189 = scalar_select %p188, %s14, 7
          %s190 = smul.addr %s189, 2
          %s191 = smul.addr %s190, 8
          %s192 = scalar_lea.vmem %s0, %s191
        $region28: #{graph_attention_embedding.1} parent=23 // pred_fallthru
          _
        // Predicated region
        $region29: #{graph_attention_embedding.1} parent=23 // pred_check
          %p193 = pneg %p60
        $region30: #{graph_attention_embedding.1} parent=23 // pred_check_branch
          %195 = sbr.rel (%p193) target = $region32
        $region31: #{graph_attention_embedding.1} parent=23 // pred_region
          %p196 = scmp.lt.s32.totalorder %s14, 7
          %s197 = scalar_select %p196, %s14, 7
          %s198 = smul.addr %s197, 4
          %s199 = smul.addr %s198, 8
          %s200 = scalar_lea.vmem %s1, %s199
        $region32: #{graph_attention_embedding.1} parent=23 // pred_fallthru
          _
        // Predicated region
        $region33: #{graph_attention_embedding.1} parent=23 // pred_check
          %p201 = pneg %p86
        $region34: #{graph_attention_embedding.1} parent=23 // pred_check_branch
          %203 = sbr.rel (%p201) target = $region36
        $region35: #{graph_attention_embedding.1} parent=23 // pred_region
          %p204 = scmp.lt.s32.totalorder %s14, 7
          %s205 = scalar_select %p204, %s14, 7
          %s206 = smul.addr %s205, 10
          %s207 = smul.addr %s206, 4
          %s208 = scalar_lea.vmem %s2, %s207
        $region36: #{graph_attention_embedding.1} parent=23 // pred_fallthru
          _
      $region24: #{graph_attention_embedding.1} parent=5 // pred_fallthru
        _
      %p209 = scmp.le.s32.totalorder 1, %s14
      %p210 = scmp.lt.s32.totalorder %s14, 9
      %p211 = pnand %p209, %p210
      %p212 = pneg %p211
      // Predicated region
      $region37: #{graph_attention_embedding.1} parent=5 // pred_check
        _
      $region38: #{graph_attention_embedding.1} parent=5 // pred_check_branch
        %214 = sbr.rel (%p211) target = $region40
      $region39: #{graph_attention_embedding.1} parent=5 // pred_region
        %s215 = ssub.s32 %s14, 1
        %p216 = scmp.lt.s32.totalorder %s19, 7
        %s217 = scalar_select %p216, %s19, 7
        %s218 = smul.addr %s217, 2
        %s219 = smul.addr %s218, 8
        %s220 = scalar_lea.vmem %s0, %s219
        %p221 = pneg %p40
        %p222 = pneg %p37
        %p223 = scmp.lt.s32.totalorder %s19, 7
        %s224 = scalar_select %p223, %s19, 7
        %s225 = smul.addr %s224, 4
        %s226 = smul.addr %s225, 8
        %s227 = scalar_lea.vmem %s1, %s226
        %p228 = pneg %p66
        %p229 = pneg %p63
        %p230 = scmp.lt.s32.totalorder %s19, 7
        %s231 = scalar_select %p230, %s19, 7
        %s232 = smul.addr %s231, 10
        %s233 = smul.addr %s232, 4
        %s234 = scalar_lea.vmem %s2, %s233
        %p235 = pneg %p92
        %p236 = pneg %p89
        %p237 = pneg %p113
        %p238 = pneg %p110
        %p239 = pneg %p134
        %p240 = pneg %p131
        %p241 = pneg %p160
        %p242 = pneg %p157
        %s243 = sand.u32 %s147, 1
        %s244 = scalar_lea.sflag [#allocation3], %s243
        %s245 = sand.u32 %s147, 1
        %s246 = smul.addr %s245, 16
        %s247 = scalar_lea.vmem [#allocation2], %s246
        %p248 = scmp.lt.s32.totalorder %s19, 7
        %s249 = scalar_select %p248, %s19, 7
        %s250 = smul.addr %s249, 2
        %s251 = smul.addr %s250, 8
        %s252 = scalar_lea.vmem %s0, %s251
        %p253 = scmp.lt.s32.totalorder %s19, 7
        %s254 = scalar_select %p253, %s19, 7
        %s255 = smul.addr %s254, 4
        %s256 = smul.addr %s255, 8
        %s257 = scalar_lea.vmem %s1, %s256
        %p258 = scmp.lt.s32.totalorder %s19, 7
        %s259 = scalar_select %p258, %s19, 7
        %s260 = smul.addr %s259, 10
        %s261 = smul.addr %s260, 4
        %s262 = scalar_lea.vmem %s2, %s261
        %v263 = vld [vmem:[%s252] sm:$0xff]
        %v264 = vld [vmem:[%s252 + $0x8] sm:$0xff]
        %v265 = vld [vmem:[%s257] sm:$0xff]
        %v266 = vld [vmem:[%s257 + $0x8] sm:$0xff]
        %v267 = vld [vmem:[%s257 + $0x10] sm:$0xff]
        %v268 = vld [vmem:[%s257 + $0x18] sm:$0xff]
        %v269 = vld [vmem:[%s262] sm:$0xf]
        %v270 = vld [vmem:[%s262 + $0x4] sm:$0xf]
        %v271 = vld [vmem:[%s262 + $0x8] sm:$0xf]
        %v272 = vld [vmem:[%s262 + $0xc] sm:$0xf]
        %v273 = vld [vmem:[%s262 + $0x10] sm:$0xf]
        %v274 = vld [vmem:[%s262 + $0x14] sm:$0xf]
        %v275 = vld [vmem:[%s262 + $0x18] sm:$0xf]
        %v276 = vld [vmem:[%s262 + $0x1c] sm:$0xf]
        %v277 = vld [vmem:[%s262 + $0x20] sm:$0xf]
        %v278 = vld [vmem:[%s262 + $0x24] sm:$0xf]
        %v279 = vunpack.c.l.bf16 %v269
        %v280 = vunpack.c.l.bf16 %v270
        %v281 = vunpack.c.l.bf16 %v271
        %v282 = vunpack.c.l.bf16 %v272
        %v283 = vunpack.c.l.bf16 %v273
        %v284 = vunpack.c.l.bf16 %v274
        %v285 = vunpack.c.l.bf16 %v275
        %v286 = vunpack.c.l.bf16 %v276
        %v287 = vunpack.c.l.bf16 %v277
        %v288 = vunpack.c.l.bf16 %v278
        %v289 = vld [vmem:[%s3] sm:$0xff]
        %v290 = vld [vmem:[%s3 + $0x8] sm:$0xff]
        %v291 = vld [vmem:[%s3 + $0x10] sm:$0xff]
        %v292 = vld [vmem:[%s3 + $0x18] sm:$0xff]
        %v293 = vld [vmem:[%s3 + $0x20] sm:$0xff]
        %v294 = vld [vmem:[%s4] sm:$0xff]
        %v295 = vld [vmem:[%s4 + $0x8] sm:$0xff]
        %v296 = vld [vmem:[%s4 + $0x10] sm:$0xff]
        %v297 = vld [vmem:[%s4 + $0x18] sm:$0xff]
        %v298 = vld [vmem:[%s4 + $0x20] sm:$0xff]
        %v299 = vld [vmem:[%s4 + $0x28] sm:$0xff]
        %v300 = vld [vmem:[%s4 + $0x30] sm:$0xff]
        %v301 = vld [vmem:[%s4 + $0x38] sm:$0xff]
        %vm302 = vcmask 326656
        %v304 = vsel %vm302, %v263, 0
        %v307 = vsel %vm302, %v264, 0
        %309 = vmatprep.subr.mxu0 0.0
        %310 = vmatpush1.msra.mxu0 %v289
        %311 = vmatprep.subr.mxu0 0.0
        %312 = vmatpush1.msra.mxu0 %v290
        %313 = vmatprep.subr.mxu0 0.0
        %314 = vmatpush1.msra.mxu0 %v291
        %315 = vmatprep.subr.mxu0 0.0
        %316 = vmatpush1.msra.mxu0 %v292
        %317 = vmatprep.subr.mxu0 0.0
        %318 = vmatpush1.msra.mxu0 %v293
        %319 = vmatprep.subr.mxu0 0.0
        %320 = vmatpush1.msra.mxu0 0.0
        %321 = vmatprep.subr.mxu0 0.0
        %322 = vmatpush1.msra.mxu0 0.0
        %323 = vmatprep.subr.mxu0 0.0
        %324 = vmatpush1.msra.mxu0 0.0
        %325 = vmatprep.subr.mxu0 0.0
        %326 = vmatpush1.msra.mxu0 0.0
        %327 = vmatprep.subr.mxu0 0.0
        %328 = vmatpush1.msra.mxu0 0.0
        %329 = vmatprep.subr.mxu0 0.0
        %330 = vmatpush1.msra.mxu0 0.0
        %331 = vmatprep.subr.mxu0 0.0
        %332 = vmatpush1.msra.mxu0 0.0
        %333 = vmatprep.subr.mxu0 0.0
        %334 = vmatpush1.msra.mxu0 0.0
        %335 = vmatprep.subr.mxu0 0.0
        %336 = vmatpush1.msra.mxu0 0.0
        %337 = vmatprep.subr.mxu0 0.0
        %338 = vmatpush1.msra.mxu0 0.0
        %339 = vmatprep.subr.mxu0 0.0
        %340 = vmatpush1.msra.mxu0 0.0
        %341 = vmatprep.subr.mxu0 0.0
        %342 = vmatpush1.msra.mxu0 0.0
        %343 = vmatprep.subr.mxu0 0.0
        %344 = vmatpush1.msra.mxu0 0.0
        %345 = vmatprep.subr.mxu0 0.0
        %346 = vmatpush1.msra.mxu0 0.0
        %347 = vmatprep.subr.mxu0 0.0
        %348 = vmatpush1.msra.mxu0 0.0
        %349 = vmatprep.subr.mxu0 0.0
        %350 = vmatpush1.msra.mxu0 0.0
        %351 = vmatprep.subr.mxu0 0.0
        %352 = vmatpush1.msra.mxu0 0.0
        %353 = vmatprep.subr.mxu0 0.0
        %354 = vmatpush1.msra.mxu0 0.0
        %355 = vmatprep.subr.mxu0 0.0
        %356 = vmatpush1.msra.mxu0 0.0
        %357 = vmatprep.subr.mxu0 0.0
        %358 = vmatpush1.msra.mxu0 0.0
        %359 = vmatprep.subr.mxu0 0.0
        %360 = vmatpush1.msra.mxu0 0.0
        %361 = vmatprep.subr.mxu0 0.0
        %362 = vmatpush1.msra.mxu0 0.0
        %363 = vmatprep.subr.mxu0 0.0
        %364 = vmatpush1.msra.mxu0 0.0
        %365 = vmatprep.subr.mxu0 0.0
        %366 = vmatpush1.msra.mxu0 0.0
        %367 = vmatprep.subr.mxu0 0.0
        %368 = vmatpush1.msra.mxu0 0.0
        %369 = vmatprep.subr.mxu0 0.0
        %370 = vmatpush1.msra.mxu0 0.0
        %371 = vmatprep.subr.mxu0 0.0
        %372 = vmatpush1.msra.mxu0 0.0
        %373 = vmatprep.mubr.f32.mxu0 0.0
        %374 = vmatmul.mubr.f32.gmra.mrb[0].mxu0 %v304
        %v375 = vpop.f32.mrb[0].mxu0
        %v376 = vadd.f32 0.0, %v375
        %v377 = vpop.f32.mrb[0].mxu0
        %378 = vmatprep.mubr.f32.mxu0 0.0
        %379 = vmatmul.mubr.f32.gmra.mrb[0].mxu0 %v307
        %v380 = vpop.f32.mrb[0].mxu0
        %v381 = vadd.f32 0.0, %v380
        %v382 = vpop.f32.mrb[0].mxu0
        %383 = vdwg.mxu0
        %vm384 = vcmask 130048
        %v386 = vsel %vm384, %v279, 0
        %v389 = vsel %vm384, %v280, 0
        %v392 = vsel %vm384, %v281, 0
        %v395 = vsel %vm384, %v282, 0
        %397 = vmatprep.subr.mxu0 0.0
        %398 = vmatpush1.msra.mxu0 %v376
        %399 = vmatprep.subr.mxu0 0.0
        %400 = vmatpush1.msra.mxu0 %v381
        %401 = vmatprep.subr.mxu0 0.0
        %402 = vmatpush1.msra.mxu0 0.0
        %403 = vmatprep.subr.mxu0 0.0
        %404 = vmatpush1.msra.mxu0 0.0
        %405 = vmatprep.subr.mxu0 0.0
        %406 = vmatpush1.msra.mxu0 0.0
        %407 = vmatprep.subr.mxu0 0.0
        %408 = vmatpush1.msra.mxu0 0.0
        %409 = vmatprep.subr.mxu0 0.0
        %410 = vmatpush1.msra.mxu0 0.0
        %411 = vmatprep.subr.mxu0 0.0
        %412 = vmatpush1.msra.mxu0 0.0
        %413 = vmatprep.subr.mxu0 0.0
        %414 = vmatpush1.msra.mxu0 0.0
        %415 = vmatprep.subr.mxu0 0.0
        %416 = vmatpush1.msra.mxu0 0.0
        %417 = vmatprep.subr.mxu0 0.0
        %418 = vmatpush1.msra.mxu0 0.0
        %419 = vmatprep.subr.mxu0 0.0
        %420 = vmatpush1.msra.mxu0 0.0
        %421 = vmatprep.subr.mxu0 0.0
        %422 = vmatpush1.msra.mxu0 0.0
        %423 = vmatprep.subr.mxu0 0.0
        %424 = vmatpush1.msra.mxu0 0.0
        %425 = vmatprep.subr.mxu0 0.0
        %426 = vmatpush1.msra.mxu0 0.0
        %427 = vmatprep.subr.mxu0 0.0
        %428 = vmatpush1.msra.mxu0 0.0
        %429 = vmatprep.subr.mxu0 0.0
        %430 = vmatpush1.msra.mxu0 0.0
        %431 = vmatprep.subr.mxu0 0.0
        %432 = vmatpush1.msra.mxu0 0.0
        %433 = vmatprep.subr.mxu0 0.0
        %434 = vmatpush1.msra.mxu0 0.0
        %435 = vmatprep.subr.mxu0 0.0
        %436 = vmatpush1.msra.mxu0 0.0
        %437 = vmatprep.subr.mxu0 0.0
        %438 = vmatpush1.msra.mxu0 0.0
        %439 = vmatprep.subr.mxu0 0.0
        %440 = vmatpush1.msra.mxu0 0.0
        %441 = vmatprep.subr.mxu0 0.0
        %442 = vmatpush1.msra.mxu0 0.0
        %443 = vmatprep.subr.mxu0 0.0
        %444 = vmatpush1.msra.mxu0 0.0
        %445 = vmatprep.subr.mxu0 0.0
        %446 = vmatpush1.msra.mxu0 0.0
        %447 = vmatprep.subr.mxu0 0.0
        %448 = vmatpush1.msra.mxu0 0.0
        %449 = vmatprep.subr.mxu0 0.0
        %450 = vmatpush1.msra.mxu0 0.0
        %451 = vmatprep.subr.mxu0 0.0
        %452 = vmatpush1.msra.mxu0 0.0
        %453 = vmatprep.subr.mxu0 0.0
        %454 = vmatpush1.msra.mxu0 0.0
        %455 = vmatprep.subr.mxu0 0.0
        %456 = vmatpush1.msra.mxu0 0.0
        %457 = vmatprep.subr.mxu0 0.0
        %458 = vmatpush1.msra.mxu0 0.0
        %459 = vmatprep.subr.mxu0 0.0
        %460 = vmatpush1.msra.mxu0 0.0
        %461 = vmatprep.mubr.f32.mxu0 0.0
        %462 = vmatmul.mubr.f32.gmra.mrb[0].mxu0 %v386
        %v463 = vpop.f32.mrb[0].mxu0
        %v464 = vadd.f32 0.0, %v463
        %v465 = vpop.f32.mrb[0].mxu0
        %466 = vmatprep.mubr.f32.mxu0 0.0
        %467 = vmatmul.mubr.f32.gmra.mrb[0].mxu0 %v389
        %v468 = vpop.f32.mrb[0].mxu0
        %v469 = vadd.f32 0.0, %v468
        %v470 = vpop.f32.mrb[0].mxu0
        %471 = vmatprep.mubr.f32.mxu0 0.0
        %472 = vmatmul.mubr.f32.gmra.mrb[0].mxu0 %v392
        %v473 = vpop.f32.mrb[0].mxu0
        %v474 = vadd.f32 0.0, %v473
        %v475 = vpop.f32.mrb[0].mxu0
        %476 = vmatprep.mubr.f32.mxu0 0.0
        %477 = vmatmul.mubr.f32.gmra.mrb[0].mxu0 %v395
        %v478 = vpop.f32.mrb[0].mxu0
        %v479 = vadd.f32 0.0, %v478
        %v480 = vpop.f32.mrb[0].mxu0
        %481 = vdwg.mxu0
        %v483 = vsel %vm384, %v283, 0
        %v486 = vsel %vm384, %v284, 0
        %v489 = vsel %vm384, %v285, 0
        %v492 = vsel %vm384, %v286, 0
        %494 = vmatprep.subr.mxu0 0.0
        %495 = vmatpush1.msra.mxu0 %v376
        %496 = vmatprep.subr.mxu0 0.0
        %497 = vmatpush1.msra.mxu0 %v381
        %498 = vmatprep.subr.mxu0 0.0
        %499 = vmatpush1.msra.mxu0 0.0
        %500 = vmatprep.subr.mxu0 0.0
        %501 = vmatpush1.msra.mxu0 0.0
        %502 = vmatprep.subr.mxu0 0.0
        %503 = vmatpush1.msra.mxu0 0.0
        %504 = vmatprep.subr.mxu0 0.0
        %505 = vmatpush1.msra.mxu0 0.0
        %506 = vmatprep.subr.mxu0 0.0
        %507 = vmatpush1.msra.mxu0 0.0
        %508 = vmatprep.subr.mxu0 0.0
        %509 = vmatpush1.msra.mxu0 0.0
        %510 = vmatprep.subr.mxu0 0.0
        %511 = vmatpush1.msra.mxu0 0.0
        %512 = vmatprep.subr.mxu0 0.0
        %513 = vmatpush1.msra.mxu0 0.0
        %514 = vmatprep.subr.mxu0 0.0
        %515 = vmatpush1.msra.mxu0 0.0
        %516 = vmatprep.subr.mxu0 0.0
        %517 = vmatpush1.msra.mxu0 0.0
        %518 = vmatprep.subr.mxu0 0.0
        %519 = vmatpush1.msra.mxu0 0.0
        %520 = vmatprep.subr.mxu0 0.0
        %521 = vmatpush1.msra.mxu0 0.0
        %522 = vmatprep.subr.mxu0 0.0
        %523 = vmatpush1.msra.mxu0 0.0
        %524 = vmatprep.subr.mxu0 0.0
        %525 = vmatpush1.msra.mxu0 0.0
        %526 = vmatprep.subr.mxu0 0.0
        %527 = vmatpush1.msra.mxu0 0.0
        %528 = vmatprep.subr.mxu0 0.0
        %529 = vmatpush1.msra.mxu0 0.0
        %530 = vmatprep.subr.mxu0 0.0
        %531 = vmatpush1.msra.mxu0 0.0
        %532 = vmatprep.subr.mxu0 0.0
        %533 = vmatpush1.msra.mxu0 0.0
        %534 = vmatprep.subr.mxu0 0.0
        %535 = vmatpush1.msra.mxu0 0.0
        %536 = vmatprep.subr.mxu0 0.0
        %537 = vmatpush1.msra.mxu0 0.0
        %538 = vmatprep.subr.mxu0 0.0
        %539 = vmatpush1.msra.mxu0 0.0
        %540 = vmatprep.subr.mxu0 0.0
        %541 = vmatpush1.msra.mxu0 0.0
        %542 = vmatprep.subr.mxu0 0.0
        %543 = vmatpush1.msra.mxu0 0.0
        %544 = vmatprep.subr.mxu0 0.0
        %545 = vmatpush1.msra.mxu0 0.0
        %546 = vmatprep.subr.mxu0 0.0
        %547 = vmatpush1.msra.mxu0 0.0
        %548 = vmatprep.subr.mxu0 0.0
        %549 = vmatpush1.msra.mxu0 0.0
        %550 = vmatprep.subr.mxu0 0.0
        %551 = vmatpush1.msra.mxu0 0.0
        %552 = vmatprep.subr.mxu0 0.0
        %553 = vmatpush1.msra.mxu0 0.0
        %554 = vmatprep.subr.mxu0 0.0
        %555 = vmatpush1.msra.mxu0 0.0
        %556 = vmatprep.subr.mxu0 0.0
        %557 = vmatpush1.msra.mxu0 0.0
        %558 = vmatprep.mubr.f32.mxu0 0.0
        %559 = vmatmul.mubr.f32.gmra.mrb[0].mxu0 %v483
        %v560 = vpop.f32.mrb[0].mxu0
        %v561 = vadd.f32 0.0, %v560
        %v562 = vpop.f32.mrb[0].mxu0
        %563 = vmatprep.mubr.f32.mxu0 0.0
        %564 = vmatmul.mubr.f32.gmra.mrb[0].mxu0 %v486
        %v565 = vpop.f32.mrb[0].mxu0
        %v566 = vadd.f32 0.0, %v565
        %v567 = vpop.f32.mrb[0].mxu0
        %568 = vmatprep.mubr.f32.mxu0 0.0
        %569 = vmatmul.mubr.f32.gmra.mrb[0].mxu0 %v489
        %v570 = vpop.f32.mrb[0].mxu0
        %v571 = vadd.f32 0.0, %v570
        %v572 = vpop.f32.mrb[0].mxu0
        %573 = vmatprep.mubr.f32.mxu0 0.0
        %574 = vmatmul.mubr.f32.gmra.mrb[0].mxu0 %v492
        %v575 = vpop.f32.mrb[0].mxu0
        %v576 = vadd.f32 0.0, %v575
        %v577 = vpop.f32.mrb[0].mxu0
        %578 = vdwg.mxu0
        %580 = vset.pattern.permute.xlu0 16
        %581 = vperm.xlu0 %580, %v265
        %v582 = vpop.permute.xlu0 %581
        %585 = vset.pattern.permute.xlu0 16
        %586 = vperm.xlu0 %585, %v266
        %v587 = vpop.permute.xlu0 %586
        %590 = vset.pattern.permute.xlu0 16
        %591 = vperm.xlu0 %590, %v267
        %v592 = vpop.permute.xlu0 %591
        %595 = vset.pattern.permute.xlu0 16
        %596 = vperm.xlu0 %595, %v268
        %v597 = vpop.permute.xlu0 %596
        %v599 = vlaneseq
        %v600 = vshrl.u32 %v599, 7
        %v601 = vsub.s32 0, %v600
        %v602 = vrot.slane %v301, %v601
        %v603 = vmul.f32 %v582, %v602
        %v604 = vmul.f32 %v587, %v602
        %v605 = vmul.f32 %v592, %v602
        %v606 = vmul.f32 %v597, %v602
        %v607 = vlaneseq
        %v608 = vshrl.u32 %v607, 7
        %v609 = vsub.s32 1, %v608
        %v610 = vrot.slane %v301, %v609
        %v611 = vadd.f32 %v603, %v610
        %v612 = vadd.f32 %v604, %v610
        %v613 = vadd.f32 %v605, %v610
        %v614 = vadd.f32 %v606, %v610
        %v615 = vand.u32 2147483647, %v611
        %vm616 = vcmp.le.f32.partialorder %v615, 0.7853982
        %vm617 = vcmp.lt.s32.totalorder %v611, 0
        %v618 = vand.u32 %v611, 2139095040
        %v619 = vshrl.u32 %v618, 23
        %v620 = vsub.s32 %v619, 127
        %v621 = vand.u32 2147483647, %v611
        %v622 = vand.u32 %v621, 8388607
        %v623 = vor.u32 %v622, 8388608
        %v624 = vsub.s32 0, %v623
        %v625 = vadd.s32 %v620, 1
        %vm626 = vcmp.gt.s32.totalorder %v625, 0
        %v627 = vsel %vm626, %v625, 0
        %v628 = vshrl.u32 %v627, 5
        %v629 = vand.u32 %v627, 31
        %v630 = vsub.s32 32, %v629
        %v631 = vshrl.u32 683565275, %v630
        %v632 = vshll.u32 683565275, %v629
        %v633 = vshrl.u32 2475754826, %v630
        %v634 = vor.u32 %v632, %v633
        %v635 = vshll.u32 2475754826, %v629
        %v636 = vshrl.u32 2131351028, %v630
        %v637 = vor.u32 %v635, %v636
        %v638 = vshll.u32 2131351028, %v629
        %v639 = vshrl.u32 2102212464, %v630
        %v640 = vor.u32 %v638, %v639
        %v641 = vshll.u32 2102212464, %v629
        %v642 = vshrl.u32 920167782, %v630
        %v643 = vor.u32 %v641, %v642
        %v644 = vshll.u32 920167782, %v629
        %v645 = vshrl.u32 1326507024, %v630
        %v646 = vor.u32 %v644, %v645
        %vm647 = vcmp.lt.s32.totalorder %v628, 1
        %vm648 = vcmp.lt.s32.totalorder %v628, 2
        %vm649 = vcmp.lt.s32.totalorder %v628, 3
        %vm650 = vcmp.lt.s32.totalorder %v628, 4
        %v651 = vsel %vm647, %v631, %v634
        %v652 = vsel %vm650, %v640, 2102212464
        %v653 = vsel %vm649, %v637, %v652
        %v654 = vsel %vm648, %v651, %v653
        %v655 = vsel %vm647, %v634, %v637
        %v656 = vsel %vm650, %v643, 920167782
        %v657 = vsel %vm649, %v640, %v656
        %v658 = vsel %vm648, %v655, %v657
        %v659 = vsel %vm647, %v637, %v640
        %v660 = vsel %vm650, %v646, 1326507024
        %v661 = vsel %vm649, %v643, %v660
        %v662 = vsel %vm648, %v659, %v661
        %v663 = vshll.u32 %v623, 8
        %v664 = vmul.u32.u64.compose %v663, %v662
        %v665 = vextract.low.u32 %v664
        %v666 = vextract.high.u32 %v664
        %v667 = vmul.u32.u64.compose %v663, %v658
        %v668 = vextract.low.u32 %v667
        %v669 = vextract.high.u32 %v667
        %v670 = vmul.u32 %v663, %v654
        %v671 = vadd.s32 %v666, %v668
        %vm672 = vc.u32 %v666, %v668
        %v673 = vadd.s32 %v669, 1
        %v674 = vsel %vm672, %v673, %v669
        %v675 = vadd.s32 %v670, %v674
        %v676 = vadd.s32 %v675, 536870912
        %v677 = vshrl.u32 %v676, 30
        %v678 = vshll.u32 %v677, 30
        %v679 = vsub.s32 %v675, %v678
        %vm680 = vcmp.lt.s32.totalorder %v679, 0
        %v681 = vsub.s32 0, %v679
        %v682 = vsel %vm680, %v681, %v679
        %v683 = vclz %v682
        %v684 = vsub.s32 %v683, 2
        %vm685 = vcmp.gt.s32.totalorder 0, %v684
        %v686 = vsel %vm685, 0, %v684
        %v687 = vsub.s32 32, %v686
        %v688 = vshll.u32 %v679, %v686
        %v689 = vshrl.u32 %v671, %v687
        %v690 = vor.u32 %v688, %v689
        %v691 = vsub.s32 4294967266, %v686
        %v692 = vadd.s32 %v691, 127
        %v693 = vshll.u32 %v692, 23
        %v694 = vor.u32 4788187, %v693
        %v695 = vand.u32 2147483647, %v694
        %v697 = vcvt.s32.f32 %v690
        %v698 = vmul.f32 %v697, %v695
        %v699 = vxor.u32 %v698, 2147483648
        %v700 = vsel %vm617, %v699, %v698
        %v701 = vsub.s32 4, %v677
        %v702 = vsel %vm617, %v701, %v677
        %v703 = vsel %vm616, %v611, %v700
        %v704 = vsel %vm616, 0, %v702
        %v705 = vcosq.f32.pop %v703
        %v706 = vsinq.f32.pop %v703
        %vm707 = vweird.f32 %v611
        %v708 = vand.u32 %v704, 3
        %vm709 = vcmp.lt.s32.totalorder %v708, 2
        %vm710 = vcmp.eq.s32.totalorder %v708, 0
        %v711 = vxor.u32 %v706, 2147483648
        %v712 = vsel %vm710, %v705, %v711
        %vm713 = vcmp.eq.s32.totalorder %v708, 2
        %v714 = vxor.u32 %v705, 2147483648
        %v715 = vsel %vm713, %v714, %v706
        %v716 = vsel %vm709, %v712, %v715
        %v717 = vsel %vm707, nan, %v716
        %v718 = vand.u32 2147483647, %v612
        %vm719 = vcmp.le.f32.partialorder %v718, 0.7853982
        %vm720 = vcmp.lt.s32.totalorder %v612, 0
        %v721 = vand.u32 %v612, 2139095040
        %v722 = vshrl.u32 %v721, 23
        %v723 = vsub.s32 %v722, 127
        %v724 = vand.u32 2147483647, %v612
        %v725 = vand.u32 %v724, 8388607
        %v726 = vor.u32 %v725, 8388608
        %v727 = vsub.s32 0, %v726
        %v728 = vadd.s32 %v723, 1
        %vm729 = vcmp.gt.s32.totalorder %v728, 0
        %v730 = vsel %vm729, %v728, 0
        %v731 = vshrl.u32 %v730, 5
        %v732 = vand.u32 %v730, 31
        %v733 = vsub.s32 32, %v732
        %v734 = vshrl.u32 683565275, %v733
        %v735 = vshll.u32 683565275, %v732
        %v736 = vshrl.u32 2475754826, %v733
        %v737 = vor.u32 %v735, %v736
        %v738 = vshll.u32 2475754826, %v732
        %v739 = vshrl.u32 2131351028, %v733
        %v740 = vor.u32 %v738, %v739
        %v741 = vshll.u32 2131351028, %v732
        %v742 = vshrl.u32 2102212464, %v733
        %v743 = vor.u32 %v741, %v742
        %v744 = vshll.u32 2102212464, %v732
        %v745 = vshrl.u32 920167782, %v733
        %v746 = vor.u32 %v744, %v745
        %v747 = vshll.u32 920167782, %v732
        %v748 = vshrl.u32 1326507024, %v733
        %v749 = vor.u32 %v747, %v748
        %vm750 = vcmp.lt.s32.totalorder %v731, 1
        %vm751 = vcmp.lt.s32.totalorder %v731, 2
        %vm752 = vcmp.lt.s32.totalorder %v731, 3
        %vm753 = vcmp.lt.s32.totalorder %v731, 4
        %v754 = vsel %vm750, %v734, %v737
        %v755 = vsel %vm753, %v743, 2102212464
        %v756 = vsel %vm752, %v740, %v755
        %v757 = vsel %vm751, %v754, %v756
        %v758 = vsel %vm750, %v737, %v740
        %v759 = vsel %vm753, %v746, 920167782
        %v760 = vsel %vm752, %v743, %v759
        %v761 = vsel %vm751, %v758, %v760
        %v762 = vsel %vm750, %v740, %v743
        %v763 = vsel %vm753, %v749, 1326507024
        %v764 = vsel %vm752, %v746, %v763
        %v765 = vsel %vm751, %v762, %v764
        %v766 = vshll.u32 %v726, 8
        %v767 = vmul.u32.u64.compose %v766, %v765
        %v768 = vextract.low.u32 %v767
        %v769 = vextract.high.u32 %v767
        %v770 = vmul.u32.u64.compose %v766, %v761
        %v771 = vextract.low.u32 %v770
        %v772 = vextract.high.u32 %v770
        %v773 = vmul.u32 %v766, %v757
        %v774 = vadd.s32 %v769, %v771
        %vm775 = vc.u32 %v769, %v771
        %v776 = vadd.s32 %v772, 1
        %v777 = vsel %vm775, %v776, %v772
        %v778 = vadd.s32 %v773, %v777
        %v779 = vadd.s32 %v778, 536870912
        %v780 = vshrl.u32 %v779, 30
        %v781 = vshll.u32 %v780, 30
        %v782 = vsub.s32 %v778, %v781
        %vm783 = vcmp.lt.s32.totalorder %v782, 0
        %v784 = vsub.s32 0, %v782
        %v785 = vsel %vm783, %v784, %v782
        %v786 = vclz %v785
        %v787 = vsub.s32 %v786, 2
        %vm788 = vcmp.gt.s32.totalorder 0, %v787
        %v789 = vsel %vm788, 0, %v787
        %v790 = vsub.s32 32, %v789
        %v791 = vshll.u32 %v782, %v789
        %v792 = vshrl.u32 %v774, %v790
        %v793 = vor.u32 %v791, %v792
        %v794 = vsub.s32 4294967266, %v789
        %v795 = vadd.s32 %v794, 127
        %v796 = vshll.u32 %v795, 23
        %v797 = vor.u32 4788187, %v796
        %v798 = vand.u32 2147483647, %v797
        %v800 = vcvt.s32.f32 %v793
        %v801 = vmul.f32 %v800, %v798
        %v802 = vxor.u32 %v801, 2147483648
        %v803 = vsel %vm720, %v802, %v801
        %v804 = vsub.s32 4, %v780
        %v805 = vsel %vm720, %v804, %v780
        %v806 = vsel %vm719, %v612, %v803
        %v807 = vsel %vm719, 0, %v805
        %v808 = vcosq.f32.pop %v806
        %v809 = vsinq.f32.pop %v806
        %vm810 = vweird.f32 %v612
        %v811 = vand.u32 %v807, 3
        %vm812 = vcmp.lt.s32.totalorder %v811, 2
        %vm813 = vcmp.eq.s32.totalorder %v811, 0
        %v814 = vxor.u32 %v809, 2147483648
        %v815 = vsel %vm813, %v808, %v814
        %vm816 = vcmp.eq.s32.totalorder %v811, 2
        %v817 = vxor.u32 %v808, 2147483648
        %v818 = vsel %vm816, %v817, %v809
        %v819 = vsel %vm812, %v815, %v818
        %v820 = vsel %vm810, nan, %v819
        %v821 = vand.u32 2147483647, %v613
        %vm822 = vcmp.le.f32.partialorder %v821, 0.7853982
        %vm823 = vcmp.lt.s32.totalorder %v613, 0
        %v824 = vand.u32 %v613, 2139095040
        %v825 = vshrl.u32 %v824, 23
        %v826 = vsub.s32 %v825, 127
        %v827 = vand.u32 2147483647, %v613
        %v828 = vand.u32 %v827, 8388607
        %v829 = vor.u32 %v828, 8388608
        %v830 = vsub.s32 0, %v829
        %v831 = vadd.s32 %v826, 1
        %vm832 = vcmp.gt.s32.totalorder %v831, 0
        %v833 = vsel %vm832, %v831, 0
        %v834 = vshrl.u32 %v833, 5
        %v835 = vand.u32 %v833, 31
        %v836 = vsub.s32 32, %v835
        %v837 = vshrl.u32 683565275, %v836
        %v838 = vshll.u32 683565275, %v835
        %v839 = vshrl.u32 2475754826, %v836
        %v840 = vor.u32 %v838, %v839
        %v841 = vshll.u32 2475754826, %v835
        %v842 = vshrl.u32 2131351028, %v836
        %v843 = vor.u32 %v841, %v842
        %v844 = vshll.u32 2131351028, %v835
        %v845 = vshrl.u32 2102212464, %v836
        %v846 = vor.u32 %v844, %v845
        %v847 = vshll.u32 2102212464, %v835
        %v848 = vshrl.u32 920167782, %v836
        %v849 = vor.u32 %v847, %v848
        %v850 = vshll.u32 920167782, %v835
        %v851 = vshrl.u32 1326507024, %v836
        %v852 = vor.u32 %v850, %v851
        %vm853 = vcmp.lt.s32.totalorder %v834, 1
        %vm854 = vcmp.lt.s32.totalorder %v834, 2
        %vm855 = vcmp.lt.s32.totalorder %v834, 3
        %vm856 = vcmp.lt.s32.totalorder %v834, 4
        %v857 = vsel %vm853, %v837, %v840
        %v858 = vsel %vm856, %v846, 2102212464
        %v859 = vsel %vm855, %v843, %v858
        %v860 = vsel %vm854, %v857, %v859
        %v861 = vsel %vm853, %v840, %v843
        %v862 = vsel %vm856, %v849, 920167782
        %v863 = vsel %vm855, %v846, %v862
        %v864 = vsel %vm854, %v861, %v863
        %v865 = vsel %vm853, %v843, %v846
        %v866 = vsel %vm856, %v852, 1326507024
        %v867 = vsel %vm855, %v849, %v866
        %v868 = vsel %vm854, %v865, %v867
        %v869 = vshll.u32 %v829, 8
        %v870 = vmul.u32.u64.compose %v869, %v868
        %v871 = vextract.low.u32 %v870
        %v872 = vextract.high.u32 %v870
        %v873 = vmul.u32.u64.compose %v869, %v864
        %v874 = vextract.low.u32 %v873
        %v875 = vextract.high.u32 %v873
        %v876 = vmul.u32 %v869, %v860
        %v877 = vadd.s32 %v872, %v874
        %vm878 = vc.u32 %v872, %v874
        %v879 = vadd.s32 %v875, 1
        %v880 = vsel %vm878, %v879, %v875
        %v881 = vadd.s32 %v876, %v880
        %v882 = vadd.s32 %v881, 536870912
        %v883 = vshrl.u32 %v882, 30
        %v884 = vshll.u32 %v883, 30
        %v885 = vsub.s32 %v881, %v884
        %vm886 = vcmp.lt.s32.totalorder %v885, 0
        %v887 = vsub.s32 0, %v885
        %v888 = vsel %vm886, %v887, %v885
        %v889 = vclz %v888
        %v890 = vsub.s32 %v889, 2
        %vm891 = vcmp.gt.s32.totalorder 0, %v890
        %v892 = vsel %vm891, 0, %v890
        %v893 = vsub.s32 32, %v892
        %v894 = vshll.u32 %v885, %v892
        %v895 = vshrl.u32 %v877, %v893
        %v896 = vor.u32 %v894, %v895
        %v897 = vsub.s32 4294967266, %v892
        %v898 = vadd.s32 %v897, 127
        %v899 = vshll.u32 %v898, 23
        %v900 = vor.u32 4788187, %v899
        %v901 = vand.u32 2147483647, %v900
        %v903 = vcvt.s32.f32 %v896
        %v904 = vmul.f32 %v903, %v901
        %v905 = vxor.u32 %v904, 2147483648
        %v906 = vsel %vm823, %v905, %v904
        %v907 = vsub.s32 4, %v883
        %v908 = vsel %vm823, %v907, %v883
        %v909 = vsel %vm822, %v613, %v906
        %v910 = vsel %vm822, 0, %v908
        %v911 = vcosq.f32.pop %v909
        %v912 = vsinq.f32.pop %v909
        %vm913 = vweird.f32 %v613
        %v914 = vand.u32 %v910, 3
        %vm915 = vcmp.lt.s32.totalorder %v914, 2
        %vm916 = vcmp.eq.s32.totalorder %v914, 0
        %v917 = vxor.u32 %v912, 2147483648
        %v918 = vsel %vm916, %v911, %v917
        %vm919 = vcmp.eq.s32.totalorder %v914, 2
        %v920 = vxor.u32 %v911, 2147483648
        %v921 = vsel %vm919, %v920, %v912
        %v922 = vsel %vm915, %v918, %v921
        %v923 = vsel %vm913, nan, %v922
        %v924 = vand.u32 2147483647, %v614
        %vm925 = vcmp.le.f32.partialorder %v924, 0.7853982
        %vm926 = vcmp.lt.s32.totalorder %v614, 0
        %v927 = vand.u32 %v614, 2139095040
        %v928 = vshrl.u32 %v927, 23
        %v929 = vsub.s32 %v928, 127
        %v930 = vand.u32 2147483647, %v614
        %v931 = vand.u32 %v930, 8388607
        %v932 = vor.u32 %v931, 8388608
        %v933 = vsub.s32 0, %v932
        %v934 = vadd.s32 %v929, 1
        %vm935 = vcmp.gt.s32.totalorder %v934, 0
        %v936 = vsel %vm935, %v934, 0
        %v937 = vshrl.u32 %v936, 5
        %v938 = vand.u32 %v936, 31
        %v939 = vsub.s32 32, %v938
        %v940 = vshrl.u32 683565275, %v939
        %v941 = vshll.u32 683565275, %v938
        %v942 = vshrl.u32 2475754826, %v939
        %v943 = vor.u32 %v941, %v942
        %v944 = vshll.u32 2475754826, %v938
        %v945 = vshrl.u32 2131351028, %v939
        %v946 = vor.u32 %v944, %v945
        %v947 = vshll.u32 2131351028, %v938
        %v948 = vshrl.u32 2102212464, %v939
        %v949 = vor.u32 %v947, %v948
        %v950 = vshll.u32 2102212464, %v938
        %v951 = vshrl.u32 920167782, %v939
        %v952 = vor.u32 %v950, %v951
        %v953 = vshll.u32 920167782, %v938
        %v954 = vshrl.u32 1326507024, %v939
        %v955 = vor.u32 %v953, %v954
        %vm956 = vcmp.lt.s32.totalorder %v937, 1
        %vm957 = vcmp.lt.s32.totalorder %v937, 2
        %vm958 = vcmp.lt.s32.totalorder %v937, 3
        %vm959 = vcmp.lt.s32.totalorder %v937, 4
        %v960 = vsel %vm956, %v940, %v943
        %v961 = vsel %vm959, %v949, 2102212464
        %v962 = vsel %vm958, %v946, %v961
        %v963 = vsel %vm957, %v960, %v962
        %v964 = vsel %vm956, %v943, %v946
        %v965 = vsel %vm959, %v952, 920167782
        %v966 = vsel %vm958, %v949, %v965
        %v967 = vsel %vm957, %v964, %v966
        %v968 = vsel %vm956, %v946, %v949
        %v969 = vsel %vm959, %v955, 1326507024
        %v970 = vsel %vm958, %v952, %v969
        %v971 = vsel %vm957, %v968, %v970
        %v972 = vshll.u32 %v932, 8
        %v973 = vmul.u32.u64.compose %v972, %v971
        %v974 = vextract.low.u32 %v973
        %v975 = vextract.high.u32 %v973
        %v976 = vmul.u32.u64.compose %v972, %v967
        %v977 = vextract.low.u32 %v976
        %v978 = vextract.high.u32 %v976
        %v979 = vmul.u32 %v972, %v963
        %v980 = vadd.s32 %v975, %v977
        %vm981 = vc.u32 %v975, %v977
        %v982 = vadd.s32 %v978, 1
        %v983 = vsel %vm981, %v982, %v978
        %v984 = vadd.s32 %v979, %v983
        %v985 = vadd.s32 %v984, 536870912
        %v986 = vshrl.u32 %v985, 30
        %v987 = vshll.u32 %v986, 30
        %v988 = vsub.s32 %v984, %v987
        %vm989 = vcmp.lt.s32.totalorder %v988, 0
        %v990 = vsub.s32 0, %v988
        %v991 = vsel %vm989, %v990, %v988
        %v992 = vclz %v991
        %v993 = vsub.s32 %v992, 2
        %vm994 = vcmp.gt.s32.totalorder 0, %v993
        %v995 = vsel %vm994, 0, %v993
        %v996 = vsub.s32 32, %v995
        %v997 = vshll.u32 %v988, %v995
        %v998 = vshrl.u32 %v980, %v996
        %v999 = vor.u32 %v997, %v998
        %v1000 = vsub.s32 4294967266, %v995
        %v1001 = vadd.s32 %v1000, 127
        %v1002 = vshll.u32 %v1001, 23
        %v1003 = vor.u32 4788187, %v1002
        %v1004 = vand.u32 2147483647, %v1003
        %v1006 = vcvt.s32.f32 %v999
        %v1007 = vmul.f32 %v1006, %v1004
        %v1008 = vxor.u32 %v1007, 2147483648
        %v1009 = vsel %vm926, %v1008, %v1007
        %v1010 = vsub.s32 4, %v986
        %v1011 = vsel %vm926, %v1010, %v986
        %v1012 = vsel %vm925, %v614, %v1009
        %v1013 = vsel %vm925, 0, %v1011
        %v1014 = vcosq.f32.pop %v1012
        %v1015 = vsinq.f32.pop %v1012
        %vm1016 = vweird.f32 %v614
        %v1017 = vand.u32 %v1013, 3
        %vm1018 = vcmp.lt.s32.totalorder %v1017, 2
        %vm1019 = vcmp.eq.s32.totalorder %v1017, 0
        %v1020 = vxor.u32 %v1015, 2147483648
        %v1021 = vsel %vm1019, %v1014, %v1020
        %vm1022 = vcmp.eq.s32.totalorder %v1017, 2
        %v1023 = vxor.u32 %v1014, 2147483648
        %v1024 = vsel %vm1022, %v1023, %v1015
        %v1025 = vsel %vm1018, %v1021, %v1024
        %v1026 = vsel %vm1016, nan, %v1025
        %1027 = vrot.lane.b32.xlu0 %v265, 8
        %v1028 = vpop.permute.xlu0 %1027
        %1029 = vrot.lane.b32.xlu0 %v266, 8
        %v1030 = vpop.permute.xlu0 %1029
        %1031 = vrot.lane.b32.xlu0 %v267, 8
        %v1032 = vpop.permute.xlu0 %1031
        %1033 = vrot.lane.b32.xlu0 %v268, 8
        %v1034 = vpop.permute.xlu0 %1033
        %vm1039 = vcmask 64512
        %v1040 = vsel %vm1039, %v717, %v1028
        %v1041 = vsel %vm1039, %v820, %v1030
        %v1042 = vsel %vm1039, %v923, %v1032
        %v1043 = vsel %vm1039, %v1026, %v1034
        %vm1044 = vcmask 195584
        %v1046 = vsel %vm1044, %v1040, 0
        %v1049 = vsel %vm1044, %v1041, 0
        %v1052 = vsel %vm1044, %v1042, 0
        %v1055 = vsel %vm1044, %v1043, 0
        %1057 = vmatprep.subr.mxu0 0.0
        %1058 = vmatpush1.msra.mxu0 %v294
        %1059 = vmatprep.subr.mxu0 0.0
        %1060 = vmatpush1.msra.mxu0 %v295
        %1061 = vmatprep.subr.mxu0 0.0
        %1062 = vmatpush1.msra.mxu0 %v296
        %1063 = vmatprep.subr.mxu0 0.0
        %1064 = vmatpush1.msra.mxu0 0.0
        %1065 = vmatprep.subr.mxu0 0.0
        %1066 = vmatpush1.msra.mxu0 0.0
        %1067 = vmatprep.subr.mxu0 0.0
        %1068 = vmatpush1.msra.mxu0 0.0
        %1069 = vmatprep.subr.mxu0 0.0
        %1070 = vmatpush1.msra.mxu0 0.0
        %1071 = vmatprep.subr.mxu0 0.0
        %1072 = vmatpush1.msra.mxu0 0.0
        %1073 = vmatprep.subr.mxu0 0.0
        %1074 = vmatpush1.msra.mxu0 0.0
        %1075 = vmatprep.subr.mxu0 0.0
        %1076 = vmatpush1.msra.mxu0 0.0
        %1077 = vmatprep.subr.mxu0 0.0
        %1078 = vmatpush1.msra.mxu0 0.0
        %1079 = vmatprep.subr.mxu0 0.0
        %1080 = vmatpush1.msra.mxu0 0.0
        %1081 = vmatprep.subr.mxu0 0.0
        %1082 = vmatpush1.msra.mxu0 0.0
        %1083 = vmatprep.subr.mxu0 0.0
        %1084 = vmatpush1.msra.mxu0 0.0
        %1085 = vmatprep.subr.mxu0 0.0
        %1086 = vmatpush1.msra.mxu0 0.0
        %1087 = vmatprep.subr.mxu0 0.0
        %1088 = vmatpush1.msra.mxu0 0.0
        %1089 = vmatprep.subr.mxu0 0.0
        %1090 = vmatpush1.msra.mxu0 0.0
        %1091 = vmatprep.subr.mxu0 0.0
        %1092 = vmatpush1.msra.mxu0 0.0
        %1093 = vmatprep.subr.mxu0 0.0
        %1094 = vmatpush1.msra.mxu0 0.0
        %1095 = vmatprep.subr.mxu0 0.0
        %1096 = vmatpush1.msra.mxu0 0.0
        %1097 = vmatprep.subr.mxu0 0.0
        %1098 = vmatpush1.msra.mxu0 0.0
        %1099 = vmatprep.subr.mxu0 0.0
        %1100 = vmatpush1.msra.mxu0 0.0
        %1101 = vmatprep.subr.mxu0 0.0
        %1102 = vmatpush1.msra.mxu0 0.0
        %1103 = vmatprep.subr.mxu0 0.0
        %1104 = vmatpush1.msra.mxu0 0.0
        %1105 = vmatprep.subr.mxu0 0.0
        %1106 = vmatpush1.msra.mxu0 0.0
        %1107 = vmatprep.subr.mxu0 0.0
        %1108 = vmatpush1.msra.mxu0 0.0
        %1109 = vmatprep.subr.mxu0 0.0
        %1110 = vmatpush1.msra.mxu0 0.0
        %1111 = vmatprep.subr.mxu0 0.0
        %1112 = vmatpush1.msra.mxu0 0.0
        %1113 = vmatprep.subr.mxu0 0.0
        %1114 = vmatpush1.msra.mxu0 0.0
        %1115 = vmatprep.subr.mxu0 0.0
        %1116 = vmatpush1.msra.mxu0 0.0
        %1117 = vmatprep.subr.mxu0 0.0
        %1118 = vmatpush1.msra.mxu0 0.0
        %1119 = vmatprep.subr.mxu0 0.0
        %1120 = vmatpush1.msra.mxu0 0.0
        %1121 = vmatprep.mubr.f32.mxu0 0.0
        %1122 = vmatmul.mubr.f32.gmra.mrb[0].mxu0 %v1046
        %v1123 = vpop.f32.mrb[0].mxu0
        %v1124 = vadd.f32 0.0, %v1123
        %v1125 = vpop.f32.mrb[0].mxu0
        %1126 = vmatprep.mubr.f32.mxu0 0.0
        %1127 = vmatmul.mubr.f32.gmra.mrb[0].mxu0 %v1049
        %v1128 = vpop.f32.mrb[0].mxu0
        %v1129 = vadd.f32 0.0, %v1128
        %v1130 = vpop.f32.mrb[0].mxu0
        %1131 = vmatprep.mubr.f32.mxu0 0.0
        %1132 = vmatmul.mubr.f32.gmra.mrb[0].mxu0 %v1052
        %v1133 = vpop.f32.mrb[0].mxu0
        %v1134 = vadd.f32 0.0, %v1133
        %v1135 = vpop.f32.mrb[0].mxu0
        %1136 = vmatprep.mubr.f32.mxu0 0.0
        %1137 = vmatmul.mubr.f32.gmra.mrb[0].mxu0 %v1055
        %v1138 = vpop.f32.mrb[0].mxu0
        %v1139 = vadd.f32 0.0, %v1138
        %v1140 = vpop.f32.mrb[0].mxu0
        %1141 = vdwg.mxu0
        %1146 = vrot.lane.b32.xlu0 %v1124, 32
        %v1147 = vpop.permute.xlu0 %1146
        %1148 = vrot.lane.b32.xlu0 %v1129, 32
        %v1149 = vpop.permute.xlu0 %1148
        %1150 = vrot.lane.b32.xlu0 %v1134, 32
        %v1151 = vpop.permute.xlu0 %1150
        %1152 = vrot.lane.b32.xlu0 %v1139, 32
        %v1153 = vpop.permute.xlu0 %1152
        %v1158 = vadd.f32 %v464, %v1147
        %v1159 = vadd.f32 %v469, %v1149
        %v1160 = vadd.f32 %v474, %v1151
        %v1161 = vadd.f32 %v479, %v1153
        %1162 = vrot.lane.b32.xlu0 %v1124, 64
        %v1163 = vpop.permute.xlu0 %1162
        %1164 = vrot.lane.b32.xlu0 %v1129, 64
        %v1165 = vpop.permute.xlu0 %1164
        %1166 = vrot.lane.b32.xlu0 %v1134, 64
        %v1167 = vpop.permute.xlu0 %1166
        %1168 = vrot.lane.b32.xlu0 %v1139, 64
        %v1169 = vpop.permute.xlu0 %1168
        %v1174 = vadd.f32 %v464, %v1163
        %v1175 = vadd.f32 %v469, %v1165
        %v1176 = vadd.f32 %v474, %v1167
        %v1177 = vadd.f32 %v479, %v1169
        %1182 = vrot.lane.b32.xlu0 %v1158, 96
        %v1183 = vpop.permute.xlu0 %1182
        %1184 = vrot.lane.b32.xlu0 %v1159, 96
        %v1185 = vpop.permute.xlu0 %1184
        %1186 = vrot.lane.b32.xlu0 %v1160, 96
        %v1187 = vpop.permute.xlu0 %1186
        %1188 = vrot.lane.b32.xlu0 %v1161, 96
        %v1189 = vpop.permute.xlu0 %1188
        %v1194 = vmul.f32 %v561, %v1183
        %v1195 = vmul.f32 %v566, %v1185
        %v1196 = vmul.f32 %v571, %v1187
        %v1197 = vmul.f32 %v576, %v1189
        %vm1198 = vcmask 261120
        %v1200 = vsel %vm1198, %v1194, 0
        %v1203 = vsel %vm1198, %v1195, 0
        %v1206 = vsel %vm1198, %v1196, 0
        %v1209 = vsel %vm1198, %v1197, 0
        %1211 = vmatprep.subr.mxu0 0.0
        %1212 = vmatpush1.msra.mxu0 %v297
        %1213 = vmatprep.subr.mxu0 0.0
        %1214 = vmatpush1.msra.mxu0 %v298
        %1215 = vmatprep.subr.mxu0 0.0
        %1216 = vmatpush1.msra.mxu0 %v299
        %1217 = vmatprep.subr.mxu0 0.0
        %1218 = vmatpush1.msra.mxu0 %v300
        %1219 = vmatprep.subr.mxu0 0.0
        %1220 = vmatpush1.msra.mxu0 0.0
        %1221 = vmatprep.subr.mxu0 0.0
        %1222 = vmatpush1.msra.mxu0 0.0
        %1223 = vmatprep.subr.mxu0 0.0
        %1224 = vmatpush1.msra.mxu0 0.0
        %1225 = vmatprep.subr.mxu0 0.0
        %1226 = vmatpush1.msra.mxu0 0.0
        %1227 = vmatprep.subr.mxu0 0.0
        %1228 = vmatpush1.msra.mxu0 0.0
        %1229 = vmatprep.subr.mxu0 0.0
        %1230 = vmatpush1.msra.mxu0 0.0
        %1231 = vmatprep.subr.mxu0 0.0
        %1232 = vmatpush1.msra.mxu0 0.0
        %1233 = vmatprep.subr.mxu0 0.0
        %1234 = vmatpush1.msra.mxu0 0.0
        %1235 = vmatprep.subr.mxu0 0.0
        %1236 = vmatpush1.msra.mxu0 0.0
        %1237 = vmatprep.subr.mxu0 0.0
        %1238 = vmatpush1.msra.mxu0 0.0
        %1239 = vmatprep.subr.mxu0 0.0
        %1240 = vmatpush1.msra.mxu0 0.0
        %1241 = vmatprep.subr.mxu0 0.0
        %1242 = vmatpush1.msra.mxu0 0.0
        %1243 = vmatprep.subr.mxu0 0.0
        %1244 = vmatpush1.msra.mxu0 0.0
        %1245 = vmatprep.subr.mxu0 0.0
        %1246 = vmatpush1.msra.mxu0 0.0
        %1247 = vmatprep.subr.mxu0 0.0
        %1248 = vmatpush1.msra.mxu0 0.0
        %1249 = vmatprep.subr.mxu0 0.0
        %1250 = vmatpush1.msra.mxu0 0.0
        %1251 = vmatprep.subr.mxu0 0.0
        %1252 = vmatpush1.msra.mxu0 0.0
        %1253 = vmatprep.subr.mxu0 0.0
        %1254 = vmatpush1.msra.mxu0 0.0
        %1255 = vmatprep.subr.mxu0 0.0
        %1256 = vmatpush1.msra.mxu0 0.0
        %1257 = vmatprep.subr.mxu0 0.0
        %1258 = vmatpush1.msra.mxu0 0.0
        %1259 = vmatprep.subr.mxu0 0.0
        %1260 = vmatpush1.msra.mxu0 0.0
        %1261 = vmatprep.subr.mxu0 0.0
        %1262 = vmatpush1.msra.mxu0 0.0
        %1263 = vmatprep.subr.mxu0 0.0
        %1264 = vmatpush1.msra.mxu0 0.0
        %1265 = vmatprep.subr.mxu0 0.0
        %1266 = vmatpush1.msra.mxu0 0.0
        %1267 = vmatprep.subr.mxu0 0.0
        %1268 = vmatpush1.msra.mxu0 0.0
        %1269 = vmatprep.subr.mxu0 0.0
        %1270 = vmatpush1.msra.mxu0 0.0
        %1271 = vmatprep.subr.mxu0 0.0
        %1272 = vmatpush1.msra.mxu0 0.0
        %1273 = vmatprep.subr.mxu0 0.0
        %1274 = vmatpush1.msra.mxu0 0.0
        %1275 = vmatprep.mubr.f32.mxu0 0.0
        %1276 = vmatmul.mubr.f32.gmra.mrb[0].mxu0 %v1200
        %v1277 = vpop.f32.mrb[0].mxu0
        %v1278 = vadd.f32 0.0, %v1277
        %v1279 = vpop.f32.mrb[0].mxu0
        %1280 = vmatprep.mubr.f32.mxu0 0.0
        %1281 = vmatmul.mubr.f32.gmra.mrb[0].mxu0 %v1203
        %v1282 = vpop.f32.mrb[0].mxu0
        %v1283 = vadd.f32 0.0, %v1282
        %v1284 = vpop.f32.mrb[0].mxu0
        %1285 = vmatprep.mubr.f32.mxu0 0.0
        %1286 = vmatmul.mubr.f32.gmra.mrb[0].mxu0 %v1206
        %v1287 = vpop.f32.mrb[0].mxu0
        %v1288 = vadd.f32 0.0, %v1287
        %v1289 = vpop.f32.mrb[0].mxu0
        %1290 = vmatprep.mubr.f32.mxu0 0.0
        %1291 = vmatmul.mubr.f32.gmra.mrb[0].mxu0 %v1209
        %v1292 = vpop.f32.mrb[0].mxu0
        %v1293 = vadd.f32 0.0, %v1292
        %v1294 = vpop.f32.mrb[0].mxu0
        %1295 = vdwg.mxu0
        %v1296 = vmul.f32 %v1278, 0.25
        %v1297 = vmul.f32 %v1283, 0.25
        %v1298 = vmul.f32 %v1288, 0.25
        %v1299 = vmul.f32 %v1293, 0.25
        %v1300 = vsel %vm1198, %v1296, -inf
        %v1301 = vsel %vm1198, %v1297, -inf
        %v1302 = vsel %vm1198, %v1298, -inf
        %v1303 = vsel %vm1198, %v1299, -inf
        %v1304 = vmax.f32 %v1300, %v1301
        %v1305 = vmax.f32 %v1302, %v1303
        %v1306 = vmax.f32 %v1304, %v1305
        %v1307 = vrot.slane %v1306, 4
        %v1308 = vmax.f32 %v1306, %v1307
        %v1309 = vrot.slane %v1308, 2
        %v1310 = vmax.f32 %v1308, %v1309
        %v1311 = vrot.slane %v1310, 1
        %v1312 = vmax.f32 %v1310, %v1311
        %v1313 = vsub.f32 %v1296, %v1312
        %v1314 = vsub.f32 %v1297, %v1312
        %v1315 = vsub.f32 %v1298, %v1312
        %v1316 = vsub.f32 %v1299, %v1312
        %v1317 = vmul.f32 %v1313, 1.442695
        %v1318 = vpow.pop %v1317
        %v1319 = vmul.f32 %v1314, 1.442695
        %v1320 = vpow.pop %v1319
        %v1321 = vmul.f32 %v1315, 1.442695
        %v1322 = vpow.pop %v1321
        %v1323 = vmul.f32 %v1316, 1.442695
        %v1324 = vpow.pop %v1323
        %v1326 = vsel %vm1198, %v287, 0
        %v1329 = vsel %vm1198, %v288, 0
        %1331 = vmatprep.subr.mxu0 0.0
        %1332 = vmatpush1.msra.mxu0 %v1318
        %1333 = vmatprep.subr.mxu0 0.0
        %1334 = vmatpush1.msra.mxu0 %v1320
        %1335 = vmatprep.subr.mxu0 0.0
        %1336 = vmatpush1.msra.mxu0 %v1322
        %1337 = vmatprep.subr.mxu0 0.0
        %1338 = vmatpush1.msra.mxu0 %v1324
        %1339 = vmatprep.subr.mxu0 0.0
        %1340 = vmatpush1.msra.mxu0 0.0
        %1341 = vmatprep.subr.mxu0 0.0
        %1342 = vmatpush1.msra.mxu0 0.0
        %1343 = vmatprep.subr.mxu0 0.0
        %1344 = vmatpush1.msra.mxu0 0.0
        %1345 = vmatprep.subr.mxu0 0.0
        %1346 = vmatpush1.msra.mxu0 0.0
        %1347 = vmatprep.subr.mxu0 0.0
        %1348 = vmatpush1.msra.mxu0 0.0
        %1349 = vmatprep.subr.mxu0 0.0
        %1350 = vmatpush1.msra.mxu0 0.0
        %1351 = vmatprep.subr.mxu0 0.0
        %1352 = vmatpush1.msra.mxu0 0.0
        %1353 = vmatprep.subr.mxu0 0.0
        %1354 = vmatpush1.msra.mxu0 0.0
        %1355 = vmatprep.subr.mxu0 0.0
        %1356 = vmatpush1.msra.mxu0 0.0
        %1357 = vmatprep.subr.mxu0 0.0
        %1358 = vmatpush1.msra.mxu0 0.0
        %1359 = vmatprep.subr.mxu0 0.0
        %1360 = vmatpush1.msra.mxu0 0.0
        %1361 = vmatprep.subr.mxu0 0.0
        %1362 = vmatpush1.msra.mxu0 0.0
        %1363 = vmatprep.subr.mxu0 0.0
        %1364 = vmatpush1.msra.mxu0 0.0
        %1365 = vmatprep.subr.mxu0 0.0
        %1366 = vmatpush1.msra.mxu0 0.0
        %1367 = vmatprep.subr.mxu0 0.0
        %1368 = vmatpush1.msra.mxu0 0.0
        %1369 = vmatprep.subr.mxu0 0.0
        %1370 = vmatpush1.msra.mxu0 0.0
        %1371 = vmatprep.subr.mxu0 0.0
        %1372 = vmatpush1.msra.mxu0 0.0
        %1373 = vmatprep.subr.mxu0 0.0
        %1374 = vmatpush1.msra.mxu0 0.0
        %1375 = vmatprep.subr.mxu0 0.0
        %1376 = vmatpush1.msra.mxu0 0.0
        %1377 = vmatprep.subr.mxu0 0.0
        %1378 = vmatpush1.msra.mxu0 0.0
        %1379 = vmatprep.subr.mxu0 0.0
        %1380 = vmatpush1.msra.mxu0 0.0
        %1381 = vmatprep.subr.mxu0 0.0
        %1382 = vmatpush1.msra.mxu0 0.0
        %1383 = vmatprep.subr.mxu0 0.0
        %1384 = vmatpush1.msra.mxu0 0.0
        %1385 = vmatprep.subr.mxu0 0.0
        %1386 = vmatpush1.msra.mxu0 0.0
        %1387 = vmatprep.subr.mxu0 0.0
        %1388 = vmatpush1.msra.mxu0 0.0
        %1389 = vmatprep.subr.mxu0 0.0
        %1390 = vmatpush1.msra.mxu0 0.0
        %1391 = vmatprep.subr.mxu0 0.0
        %1392 = vmatpush1.msra.mxu0 0.0
        %1393 = vmatprep.subr.mxu0 0.0
        %1394 = vmatpush1.msra.mxu0 0.0
        %1395 = vmatprep.mubr.f32.mxu0 0.0
        %1396 = vmatmul.mubr.f32.gmra.mrb[0].mxu0 %v1326
        %v1397 = vpop.f32.mrb[0].mxu0
        %v1398 = vadd.f32 0.0, %v1397
        %v1399 = vpop.f32.mrb[0].mxu0
        %1400 = vmatprep.mubr.f32.mxu0 0.0
        %1401 = vmatmul.mubr.f32.gmra.mrb[0].mxu0 %v1329
        %v1402 = vpop.f32.mrb[0].mxu0
        %v1403 = vadd.f32 0.0, %v1402
        %v1404 = vpop.f32.mrb[0].mxu0
        %1405 = vdwg.mxu0
        %1406 = vmatprep.subr.mxu0 0.0
        %1407 = vmatpush1.msra.mxu0 %v1398
        %1408 = vmatprep.subr.mxu0 0.0
        %1409 = vmatpush1.msra.mxu0 %v1403
        %1410 = vmatprep.subr.mxu0 0.0
        %1411 = vmatpush1.msra.mxu0 0.0
        %1412 = vmatprep.subr.mxu0 0.0
        %1413 = vmatpush1.msra.mxu0 0.0
        %1414 = vmatprep.subr.mxu0 0.0
        %1415 = vmatpush1.msra.mxu0 0.0
        %1416 = vmatprep.subr.mxu0 0.0
        %1417 = vmatpush1.msra.mxu0 0.0
        %1418 = vmatprep.subr.mxu0 0.0
        %1419 = vmatpush1.msra.mxu0 0.0
        %1420 = vmatprep.subr.mxu0 0.0
        %1421 = vmatpush1.msra.mxu0 0.0
        %1422 = vmatprep.subr.mxu0 0.0
        %1423 = vmatpush1.msra.mxu0 0.0
        %1424 = vmatprep.subr.mxu0 0.0
        %1425 = vmatpush1.msra.mxu0 0.0
        %1426 = vmatprep.subr.mxu0 0.0
        %1427 = vmatpush1.msra.mxu0 0.0
        %1428 = vmatprep.subr.mxu0 0.0
        %1429 = vmatpush1.msra.mxu0 0.0
        %1430 = vmatprep.subr.mxu0 0.0
        %1431 = vmatpush1.msra.mxu0 0.0
        %1432 = vmatprep.subr.mxu0 0.0
        %1433 = vmatpush1.msra.mxu0 0.0
        %1434 = vmatprep.subr.mxu0 0.0
        %1435 = vmatpush1.msra.mxu0 0.0
        %1436 = vmatprep.subr.mxu0 0.0
        %1437 = vmatpush1.msra.mxu0 0.0
        %1438 = vmatprep.subr.mxu0 0.0
        %1439 = vmatpush1.msra.mxu0 0.0
        %1440 = vmatprep.subr.mxu0 0.0
        %1441 = vmatpush1.msra.mxu0 0.0
        %1442 = vmatprep.subr.mxu0 0.0
        %1443 = vmatpush1.msra.mxu0 0.0
        %1444 = vmatprep.subr.mxu0 0.0
        %1445 = vmatpush1.msra.mxu0 0.0
        %1446 = vmatprep.subr.mxu0 0.0
        %1447 = vmatpush1.msra.mxu0 0.0
        %1448 = vmatprep.subr.mxu0 0.0
        %1449 = vmatpush1.msra.mxu0 0.0
        %1450 = vmatprep.subr.mxu0 0.0
        %1451 = vmatpush1.msra.mxu0 0.0
        %1452 = vmatprep.subr.mxu0 0.0
        %1453 = vmatpush1.msra.mxu0 0.0
        %1454 = vmatprep.subr.mxu0 0.0
        %1455 = vmatpush1.msra.mxu0 0.0
        %1456 = vmatprep.subr.mxu0 0.0
        %1457 = vmatpush1.msra.mxu0 0.0
        %1458 = vmatprep.subr.mxu0 0.0
        %1459 = vmatpush1.msra.mxu0 0.0
        %1460 = vmatprep.subr.mxu0 0.0
        %1461 = vmatpush1.msra.mxu0 0.0
        %1462 = vmatprep.subr.mxu0 0.0
        %1463 = vmatpush1.msra.mxu0 0.0
        %1464 = vmatprep.subr.mxu0 0.0
        %1465 = vmatpush1.msra.mxu0 0.0
        %1466 = vmatprep.subr.mxu0 0.0
        %1467 = vmatpush1.msra.mxu0 0.0
        %1468 = vmatprep.subr.mxu0 0.0
        %1469 = vmatpush1.msra.mxu0 0.0
        %1470 = vmatprep.mubr.f32.mxu0 0.0
        %1471 = vmatmul.mubr.f32.gmra.mrb[0].mxu0 %v483
        %v1472 = vpop.f32.mrb[0].mxu0
        %v1473 = vadd.f32 0.0, %v1472
        %v1474 = vpop.f32.mrb[0].mxu0
        %1475 = vmatprep.mubr.f32.mxu0 0.0
        %1476 = vmatmul.mubr.f32.gmra.mrb[0].mxu0 %v486
        %v1477 = vpop.f32.mrb[0].mxu0
        %v1478 = vadd.f32 0.0, %v1477
        %v1479 = vpop.f32.mrb[0].mxu0
        %1480 = vmatprep.mubr.f32.mxu0 0.0
        %1481 = vmatmul.mubr.f32.gmra.mrb[0].mxu0 %v489
        %v1482 = vpop.f32.mrb[0].mxu0
        %v1483 = vadd.f32 0.0, %v1482
        %v1484 = vpop.f32.mrb[0].mxu0
        %1485 = vmatprep.mubr.f32.mxu0 0.0
        %1486 = vmatmul.mubr.f32.gmra.mrb[0].mxu0 %v492
        %v1487 = vpop.f32.mrb[0].mxu0
        %v1488 = vadd.f32 0.0, %v1487
        %v1489 = vpop.f32.mrb[0].mxu0
        %1490 = vdwg.mxu0
        %v1491 = vrcp.pop %v1473
        %v1492 = vmul.f32 %v1318, %v1491
        %v1493 = vrcp.pop %v1478
        %v1494 = vmul.f32 %v1320, %v1493
        %v1495 = vrcp.pop %v1483
        %v1496 = vmul.f32 %v1322, %v1495
        %v1497 = vrcp.pop %v1488
        %v1498 = vmul.f32 %v1324, %v1497
        %1503 = vrot.lane.b32.xlu0 %v1174, 64
        %v1504 = vpop.permute.xlu0 %1503
        %1505 = vrot.lane.b32.xlu0 %v1175, 64
        %v1506 = vpop.permute.xlu0 %1505
        %1507 = vrot.lane.b32.xlu0 %v1176, 64
        %v1508 = vpop.permute.xlu0 %1507
        %1509 = vrot.lane.b32.xlu0 %v1177, 64
        %v1510 = vpop.permute.xlu0 %1509
        %v1515 = vmul.f32 %v1492, %v1504
        %v1516 = vmul.f32 %v1494, %v1506
        %v1517 = vmul.f32 %v1496, %v1508
        %v1518 = vmul.f32 %v1498, %v1510
        %1521 = vrot.lane.b32.xlu0 %v376, 32
        %v1522 = vpop.permute.xlu0 %1521
        %1523 = vrot.lane.b32.xlu0 %v381, 32
        %v1524 = vpop.permute.xlu0 %1523
        %1527 = vmatprep.subr.mxu0 0.0
        %1528 = vmatpush1.msra.mxu0 %v1515
        %1529 = vmatprep.subr.mxu0 0.0
        %1530 = vmatpush1.msra.mxu0 %v1516
        %1531 = vmatprep.subr.mxu0 0.0
        %1532 = vmatpush1.msra.mxu0 %v1517
        %1533 = vmatprep.subr.mxu0 0.0
        %1534 = vmatpush1.msra.mxu0 %v1518
        %1535 = vmatprep.subr.mxu0 0.0
        %1536 = vmatpush1.msra.mxu0 0.0
        %1537 = vmatprep.subr.mxu0 0.0
        %1538 = vmatpush1.msra.mxu0 0.0
        %1539 = vmatprep.subr.mxu0 0.0
        %1540 = vmatpush1.msra.mxu0 0.0
        %1541 = vmatprep.subr.mxu0 0.0
        %1542 = vmatpush1.msra.mxu0 0.0
        %1543 = vmatprep.subr.mxu0 0.0
        %1544 = vmatpush1.msra.mxu0 0.0
        %1545 = vmatprep.subr.mxu0 0.0
        %1546 = vmatpush1.msra.mxu0 0.0
        %1547 = vmatprep.subr.mxu0 0.0
        %1548 = vmatpush1.msra.mxu0 0.0
        %1549 = vmatprep.subr.mxu0 0.0
        %1550 = vmatpush1.msra.mxu0 0.0
        %1551 = vmatprep.subr.mxu0 0.0
        %1552 = vmatpush1.msra.mxu0 0.0
        %1553 = vmatprep.subr.mxu0 0.0
        %1554 = vmatpush1.msra.mxu0 0.0
        %1555 = vmatprep.subr.mxu0 0.0
        %1556 = vmatpush1.msra.mxu0 0.0
        %1557 = vmatprep.subr.mxu0 0.0
        %1558 = vmatpush1.msra.mxu0 0.0
        %1559 = vmatprep.subr.mxu0 0.0
        %1560 = vmatpush1.msra.mxu0 0.0
        %1561 = vmatprep.subr.mxu0 0.0
        %1562 = vmatpush1.msra.mxu0 0.0
        %1563 = vmatprep.subr.mxu0 0.0
        %1564 = vmatpush1.msra.mxu0 0.0
        %1565 = vmatprep.subr.mxu0 0.0
        %1566 = vmatpush1.msra.mxu0 0.0
        %1567 = vmatprep.subr.mxu0 0.0
        %1568 = vmatpush1.msra.mxu0 0.0
        %1569 = vmatprep.subr.mxu0 0.0
        %1570 = vmatpush1.msra.mxu0 0.0
        %1571 = vmatprep.subr.mxu0 0.0
        %1572 = vmatpush1.msra.mxu0 0.0
        %1573 = vmatprep.subr.mxu0 0.0
        %1574 = vmatpush1.msra.mxu0 0.0
        %1575 = vmatprep.subr.mxu0 0.0
        %1576 = vmatpush1.msra.mxu0 0.0
        %1577 = vmatprep.subr.mxu0 0.0
        %1578 = vmatpush1.msra.mxu0 0.0
        %1579 = vmatprep.subr.mxu0 0.0
        %1580 = vmatpush1.msra.mxu0 0.0
        %1581 = vmatprep.subr.mxu0 0.0
        %1582 = vmatpush1.msra.mxu0 0.0
        %1583 = vmatprep.subr.mxu0 0.0
        %1584 = vmatpush1.msra.mxu0 0.0
        %1585 = vmatprep.subr.mxu0 0.0
        %1586 = vmatpush1.msra.mxu0 0.0
        %1587 = vmatprep.subr.mxu0 0.0
        %1588 = vmatpush1.msra.mxu0 0.0
        %1589 = vmatprep.subr.mxu0 0.0
        %1590 = vmatpush1.msra.mxu0 0.0
        %1591 = vmatprep.mubr.f32.mxu0 0.0
        %1592 = vmatmul.mubr.f32.gmra.mrb[0].mxu0 %v1326
        %v1593 = vpop.f32.mrb[0].mxu0
        %v1594 = vadd.f32 %v1522, %v1593
        %v1595 = vpop.f32.mrb[0].mxu0
        %1596 = vmatprep.mubr.f32.mxu0 0.0
        %1597 = vmatmul.mubr.f32.gmra.mrb[0].mxu0 %v1329
        %v1598 = vpop.f32.mrb[0].mxu0
        %v1599 = vadd.f32 %v1524, %v1598
        %v1600 = vpop.f32.mrb[0].mxu0
        %1601 = vdwg.mxu0
        %v1602 = vsel %vm1198, %v1594, 0.0
        %v1603 = vsel %vm1198, %v1599, 0.0
        %1604 = vst [vmem:[%s247] sm:$0xff] %v1602
        %1605 = vst [vmem:[%s247 + $0x8] sm:$0xff] %v1603
        %s1606 = sand.u32 %s147, 1
        %s1607 = scalar_lea.sflag [#allocation3], %s1606
        %s1608 = sand.u32 %s147, 1
        %s1609 = smul.addr %s1608, 16
        %s1610 = scalar_lea.vmem [#allocation2], %s1609
        // Predicated region
        $region41: #{graph_attention_embedding.1} parent=39 // pred_check
          %p1611 = pneg %p157
        $region42: #{graph_attention_embedding.1} parent=39 // pred_check_branch
          %1613 = sbr.rel (%p1611) target = $region44
        $region43: #{graph_attention_embedding.1} parent=39 // pred_region
          %s1615 = ssub.s32 256, 256
          %1616 = vsyncadd %s1607, %s1615
          %s1617 = smul.addr %s19, 2
          %s1618 = smul.addr %s1617, 128
          %s1619 = scalar_lea.hbm %s5, %s1618
          %s1620 = sshll.u32 %s1610, 4
          %s1621 = int_to_ptr.vmem [resolvable:$true] %s1620
          %1626 = dma.vmem_to_hbm [thread:$0]  %s1621, 256, %s1619, %s1607, 128, 128, 8
        $region44: #{graph_attention_embedding.1} parent=39 // pred_fallthru
          _
      $region40: #{graph_attention_embedding.1} parent=5 // pred_fallthru
        _
      %p1627 = scmp.le.s32.totalorder 2, %s14
      // Predicated region
      $region45: #{graph_attention_embedding.1} parent=5 // pred_check
        %p1628 = pneg %p1627
      $region46: #{graph_attention_embedding.1} parent=5 // pred_check_branch
        %1630 = sbr.rel (%p1628) target = $region48
      $region47: #{graph_attention_embedding.1} parent=5 // pred_region
        %s1631 = ssub.s32 %s14, 2
        // Predicated region
        $region49: #{graph_attention_embedding.1} parent=47 // pred_check
          %p1632 = pneg %p163
        $region50: #{graph_attention_embedding.1} parent=47 // pred_check_branch
          %1634 = sbr.rel (%p1632) target = $region52
        $region51: #{graph_attention_embedding.1} parent=47 // pred_region
          %s1635 = sand.u32 %s148, 1
          %s1636 = scalar_lea.sflag [#allocation3], %s1635
          %s1637 = sand.u32 %s148, 1
          %s1638 = smul.addr %s1637, 16
          %s1639 = scalar_lea.vmem [#allocation2], %s1638
          %1640 = dma.done %s1636, 256
        $region52: #{graph_attention_embedding.1} parent=47 // pred_fallthru
          _
      $region48: #{graph_attention_embedding.1} parent=5 // pred_fallthru
        _
    $region6: #{graph_attention_embedding.1} parent=1 // loop_footer
      %s18 = sadd.s32 1, %s14
    $region7: #{graph_attention_embedding.1} parent=1 // loop_footer_branch
      %13 = sbr.rel target = $region3
    $region8: #{graph_attention_embedding.1} parent=1 // loop_exit
      _
    %1641 = vsyncpa [#allocation3], 1
    %s1642 = scalar_lea.sflag [#allocation3], 1
    %1643 = vsyncpa %s1642, 1

</llo_original>
